<compile_context>
chip_gen: v6e
topology: v6e:2x2x1
jax: 0.10.0
libtpu: 0.0.40
codegen_flags: <defaults>
</compile_context>

<pallas_src>
import math
import functools

import jax
import jax.numpy as jnp
from jax import lax
from jax.experimental import pallas as pl
from jax.experimental.pallas import tpu as pltpu


def _layernorm(h, w, b, eps=1e-5):
    # h: (rows, C) f32, w/b: (1, C) f32
    mean = jnp.mean(h, axis=-1, keepdims=True)
    var = jnp.mean((h - mean) ** 2, axis=-1, keepdims=True)
    return (h - mean) * lax.rsqrt(var + eps) * w + b


def _gelu_tanh(x):
    # GELU(approximate='tanh'), same as PyTorch, kept in f32
    c = math.sqrt(2.0 / math.pi)
    return 0.5 * x * (1.0 + jnp.tanh(c * (x + 0.044715 * x * x * x)))


def block_kernel(x_ref,
                 ln1w_ref, ln1b_ref,
                 wqkv_ref, bqkv_ref,
                 wproj_ref, bproj_ref,
                 ln2w_ref, ln2b_ref,
                 wfc_ref, bfc_ref,
                 wfp_ref, bfp_ref,
                 o_ref,
                 k_sc, v_sc, y_sc, m_sc, l_sc, acc_sc,
                 *, n_head):
    tq, C = x_ref.shape           # this query tile
    hd = C // n_head
    scale = 1.0 / math.sqrt(hd)
    qi = pl.program_id(1)
    bf16 = jnp.bfloat16

    # ---- per-tile LN1 + QKV projection; K/V appended to persistent scratch.
    x_t = x_ref[...]                                               # (tq, C) f32
    h1 = _layernorm(x_t, ln1w_ref[...], ln1b_ref[...])
    qkv = jnp.dot(h1.astype(bf16), wqkv_ref[...],
                  preferred_element_type=jnp.float32) + bqkv_ref[...]
    q_t = (qkv[:, 0:C] * scale).astype(bf16)                       # scale folded in
    q_start = pl.multiple_of(qi * tq, tq)
    k_sc[pl.ds(q_start, tq), :] = qkv[:, C:2 * C].astype(bf16)
    v_sc[pl.ds(q_start, tq), :] = qkv[:, 2 * C:3 * C].astype(bf16)

    # local causal mask for the diagonal KV block only
    causal_local = (lax.broadcasted_iota(jnp.int32, (tq, tq), 0) >=
                    lax.broadcasted_iota(jnp.int32, (tq, tq), 1))

    # ---- flash-style causal attention: per head, loop KV tiles 0..qi only,
    #      online softmax; per-head outputs packed into y_sc for one fused
    #      (tq, C) @ (C, C) output projection afterwards.
    n_kv = qi + 1
    for h in range(n_head):
        lo, hi = h * hd, (h + 1) * hd
        q_h = q_t[:, lo:hi]                                        # (tq, hd) bf16

        m_sc[...] = jnp.full((tq, 1), -1e30, jnp.float32)
        l_sc[...] = jnp.zeros((tq, 1), jnp.float32)
        acc_sc[...] = jnp.zeros((tq, hd), jnp.float32)

        @pl.loop(0, n_kv)
        def _(j):
            kv0 = pl.multiple_of(j * tq, tq)
            k_hj = k_sc[pl.ds(kv0, tq), lo:hi]                     # (tq, hd) bf16
            v_hj = v_sc[pl.ds(kv0, tq), lo:hi]                     # (tq, hd) bf16
            # scores: contract over hd ('qd,kd->qk'), f32 accumulation
            s = lax.dot_general(q_h, k_hj, (((1,), (1,)), ((), ())),
                                preferred_element_type=jnp.float32)  # (tq, tq)
            # mask only needed on the diagonal KV block
            s = jnp.where(jnp.logical_or(j < qi, causal_local), s, -1e30)
            m_prev = m_sc[...]
            m_new = jnp.maximum(m_prev, jnp.max(s, axis=-1, keepdims=True))
            alpha = jnp.exp(m_prev - m_new)
            p = jnp.exp(s - m_new)                                 # f32
            l_sc[...] = alpha * l_sc[...] + jnp.sum(p, axis=-1, keepdims=True)
            acc_sc[...] = alpha * acc_sc[...] + jnp.dot(
                p.astype(bf16), v_hj, preferred_element_type=jnp.float32)
            m_sc[...] = m_new

        inv_l = pl.reciprocal(l_sc[...], approx=True)
        y_sc[:, lo:hi] = (acc_sc[...] * inv_l).astype(bf16)

    # fused output projection: C-deep contraction, one MXU pass
    attn = jnp.dot(y_sc[...], wproj_ref[...],
                   preferred_element_type=jnp.float32) + bproj_ref[...]

    x2 = x_t + attn                                                # residual 1

    # ---- MLP: chunked over 4C, GELU fused per chunk
    h2 = _layernorm(x2, ln2w_ref[...], ln2b_ref[...]).astype(bf16)
    H4 = 4 * C
    ck = H4
    for cand in (512, 384, 256, 128):
        if H4 % cand == 0:
            ck = cand
            break
    # TODO(synk): pad 4C to a multiple of 128 instead of falling back to the
    # full-width intermediate when C is not a multiple of 32.
    mlp = jnp.zeros((tq, C), jnp.float32)
    for c in range(H4 // ck):
        lo, hi = c * ck, (c + 1) * ck
        f = jnp.dot(h2, wfc_ref[:, lo:hi],
                    preferred_element_type=jnp.float32) + bfc_ref[:, lo:hi]
        g = _gelu_tanh(f)                                          # f32
        mlp = mlp + jnp.dot(g.astype(bf16), wfp_ref[lo:hi, :],
                            preferred_element_type=jnp.float32)
    mlp = mlp + bfp_ref[...]

    o_ref[...] = (x2 + mlp).astype(o_ref.dtype)                    # residual 2


def _pick_tq(T):
    # query-tile size: multiple of 8 dividing T, capped per TPU generation
    try:
        kind = jax.devices()[0].device_kind.lower()
    except Exception:
        kind = ""
    tq_max = 128 if "v5" in kind else 256    # v5e MXU is 128-wide
    if T <= tq_max:
        return T
    for tq in (tq_max, 128, 64, 32, 16, 8):
        if tq <= tq_max and T % tq == 0:
            return tq
    return T


def _vmem_limit_bytes():
    # generation-aware budget with headroom below physical VMEM
    try:
        cap = pltpu.get_tpu_info().vmem_capacity_bytes
    except Exception:
        cap = 128 * 1024 * 1024
    return max(32 * 1024 * 1024, min(int(cap * 0.8), 112 * 1024 * 1024))


def gpt_block(x, params, n_head):
    B, T, C = x.shape
    assert C % n_head == 0
    hd = C // n_head
    tq = _pick_tq(T)
    nq = T // tq
    bf16 = jnp.bfloat16

    def rep2d(shape):
        # grid-invariant weights / biases
        return pl.BlockSpec(shape, lambda b, i: (0, 0))

    in_specs = [
        pl.BlockSpec((pl.Squeezed(), tq, C), lambda b, i: (b, i, 0)),  # x tile
        rep2d((1, C)), rep2d((1, C)),                                  # ln1 w, b
        rep2d((C, 3 * C)), rep2d((1, 3 * C)),                          # c_attn (bf16 W)
        rep2d((C, C)), rep2d((1, C)),                                  # attn c_proj
        rep2d((1, C)), rep2d((1, C)),                                  # ln2 w, b
        rep2d((C, 4 * C)), rep2d((1, 4 * C)),                          # c_fc
        rep2d((4 * C, C)), rep2d((1, C)),                              # mlp c_proj
    ]
    out_specs = pl.BlockSpec((pl.Squeezed(), tq, C), lambda b, i: (b, i, 0))

    kernel = functools.partial(block_kernel, n_head=n_head)

    return pl.pallas_call(
        kernel,
        out_shape=jax.ShapeDtypeStruct((B, T, C), x.dtype),
        grid_spec=pltpu.PrefetchScalarGridSpec(
            num_scalar_prefetch=0,
            grid=(B, nq),
            in_specs=in_specs,
            out_specs=out_specs,
            scratch_shapes=[pltpu.VMEM((T, C), bf16),            # K (persists over q tiles)
                            pltpu.VMEM((T, C), bf16),            # V (persists over q tiles)
                            pltpu.VMEM((tq, C), bf16),           # per-head attn outputs
                            pltpu.VMEM((tq, 1), jnp.float32),    # online-softmax max
                            pltpu.VMEM((tq, 1), jnp.float32),    # online-softmax denom
                            pltpu.VMEM((tq, hd), jnp.float32)],  # online-softmax acc
        ),
        compiler_params=pltpu.CompilerParams(
            dimension_semantics=("parallel", "arbitrary"),
            vmem_limit_bytes=_vmem_limit_bytes()),
    )(x,
      params["ln1_w"], params["ln1_b"],
      params["wqkv"].astype(bf16), params["bqkv"],
      params["wproj"].astype(bf16), params["bproj"],
      params["ln2_w"], params["ln2_b"],
      params["wfc"].astype(bf16), params["bfc"],
      params["wfp"].astype(bf16), params["bfp"])


def init_params(key, C):
    ks = jax.random.split(key, 4)
    std = 0.02
    return {
        "ln1_w": jnp.ones((1, C), jnp.float32),
        "ln1_b": jnp.zeros((1, C), jnp.float32),
        "wqkv": std * jax.random.normal(ks[0], (C, 3 * C), jnp.float32),
        "bqkv": jnp.zeros((1, 3 * C), jnp.float32),
        "wproj": std * jax.random.normal(ks[1], (C, C), jnp.float32),
        "bproj": jnp.zeros((1, C), jnp.float32),
        "ln2_w": jnp.ones((1, C), jnp.float32),
        "ln2_b": jnp.zeros((1, C), jnp.float32),
        "wfc": std * jax.random.normal(ks[2], (C, 4 * C), jnp.float32),
        "bfc": jnp.zeros((1, 4 * C), jnp.float32),
        "wfp": std * jax.random.normal(ks[3], (4 * C, C), jnp.float32),
        "bfp": jnp.zeros((1, C), jnp.float32),
    }


def ref_block(x, p, n_head):
    # pure-JAX f32 reference matching the PyTorch Block
    def ln(h, w, b):
        mu = h.mean(-1, keepdims=True)
        var = ((h - mu) ** 2).mean(-1, keepdims=True)
        return (h - mu) * lax.rsqrt(var + 1e-5) * w + b
    B, T, C = x.shape
    hd = C // n_head
    h1 = ln(x, p["ln1_w"], p["ln1_b"])
    qkv = h1 @ p["wqkv"] + p["bqkv"]
    q, k, v = jnp.split(qkv, 3, axis=-1)
    q = q.reshape(B, T, n_head, hd).transpose(0, 2, 1, 3)
    k = k.reshape(B, T, n_head, hd).transpose(0, 2, 1, 3)
    v = v.reshape(B, T, n_head, hd).transpose(0, 2, 1, 3)
    s = (q @ jnp.swapaxes(k, -1, -2)) / math.sqrt(hd)
    mask = jnp.tril(jnp.ones((T, T), bool))
    s = jnp.where(mask, s, -jnp.inf)
    a = jax.nn.softmax(s, axis=-1)
    y = (a @ v).transpose(0, 2, 1, 3).reshape(B, T, C)
    x = x + y @ p["wproj"] + p["bproj"]
    h2 = ln(x, p["ln2_w"], p["ln2_b"])
    f = h2 @ p["wfc"] + p["bfc"]
    g = 0.5 * f * (1.0 + jnp.tanh(math.sqrt(2.0 / math.pi) * (f + 0.044715 * f ** 3)))
    return x + g @ p["wfp"] + p["bfp"]


if __name__ == "__main__":
    B, T, C, n_head = 2, 8, 32, 4
    key = jax.random.PRNGKey(0)
    kx, kp = jax.random.split(key)

    x = jax.random.normal(kx, (B, T, C), jnp.float32)
    params = init_params(kp, C)

    out = gpt_block(x, params, n_head)
    jax.block_until_ready(out)
    assert out.shape == (B, T, C)

    ref = ref_block(x, params, n_head)
    err = float(jnp.max(jnp.abs(out - ref)))
    assert err < 2e-2, f"max abs error vs f32 reference: {err}"

    print("KERNEL_OK")
</pallas_src>

<mosaic_0001>
module attributes {stable_mosaic.version = 11 : i64} {
  func.func @block_kernel(%arg0: i32, %arg1: i32, %arg2: memref<1x8x32xf32, #tpu.memory_space<vmem>>, %arg3: memref<1x32xf32, #tpu.memory_space<vmem>>, %arg4: memref<1x32xf32, #tpu.memory_space<vmem>>, %arg5: memref<32x96xbf16, #tpu.memory_space<vmem>>, %arg6: memref<1x96xf32, #tpu.memory_space<vmem>>, %arg7: memref<32x32xbf16, #tpu.memory_space<vmem>>, %arg8: memref<1x32xf32, #tpu.memory_space<vmem>>, %arg9: memref<1x32xf32, #tpu.memory_space<vmem>>, %arg10: memref<1x32xf32, #tpu.memory_space<vmem>>, %arg11: memref<32x128xbf16, #tpu.memory_space<vmem>>, %arg12: memref<1x128xf32, #tpu.memory_space<vmem>>, %arg13: memref<128x32xbf16, #tpu.memory_space<vmem>>, %arg14: memref<1x32xf32, #tpu.memory_space<vmem>>, %arg15: memref<1x8x32xf32, #tpu.memory_space<vmem>>, %arg16: memref<8x32xbf16, #tpu.memory_space<vmem>>, %arg17: memref<8x32xbf16, #tpu.memory_space<vmem>>, %arg18: memref<8x32xbf16, #tpu.memory_space<vmem>>, %arg19: memref<8x1xf32, #tpu.memory_space<vmem>>, %arg20: memref<8x1xf32, #tpu.memory_space<vmem>>, %arg21: memref<8x8xf32, #tpu.memory_space<vmem>>) attributes {dimension_semantics = [#tpu.dimension_semantics<parallel>, #tpu.dimension_semantics<arbitrary>], iteration_bounds = array<i64: 2, 1>, scalar_prefetch = 0 : i64, scratch_operands = 6 : i64, tpu.core_type = #tpu.core_type<tc>, window_params = [{transform_indices = @transform_0, window_bounds = array<i64: 1, 8, 32>}, {pipeline_mode = #tpu.pipeline_mode<synchronous>, transform_indices = @transform_1, window_bounds = array<i64: 1, 32>}, {pipeline_mode = #tpu.pipeline_mode<synchronous>, transform_indices = @transform_2, window_bounds = array<i64: 1, 32>}, {pipeline_mode = #tpu.pipeline_mode<synchronous>, transform_indices = @transform_3, window_bounds = array<i64: 32, 96>}, {pipeline_mode = #tpu.pipeline_mode<synchronous>, transform_indices = @transform_4, window_bounds = array<i64: 1, 96>}, {pipeline_mode = #tpu.pipeline_mode<synchronous>, transform_indices = @transform_5, window_bounds = array<i64: 32, 32>}, {pipeline_mode = #tpu.pipeline_mode<synchronous>, transform_indices = @transform_6, window_bounds = array<i64: 1, 32>}, {pipeline_mode = #tpu.pipeline_mode<synchronous>, transform_indices = @transform_7, window_bounds = array<i64: 1, 32>}, {pipeline_mode = #tpu.pipeline_mode<synchronous>, transform_indices = @transform_8, window_bounds = array<i64: 1, 32>}, {pipeline_mode = #tpu.pipeline_mode<synchronous>, transform_indices = @transform_9, window_bounds = array<i64: 32, 128>}, {pipeline_mode = #tpu.pipeline_mode<synchronous>, transform_indices = @transform_10, window_bounds = array<i64: 1, 128>}, {pipeline_mode = #tpu.pipeline_mode<synchronous>, transform_indices = @transform_11, window_bounds = array<i64: 128, 32>}, {pipeline_mode = #tpu.pipeline_mode<synchronous>, transform_indices = @transform_12, window_bounds = array<i64: 1, 32>}, {transform_indices = @transform_13, window_bounds = array<i64: 1, 8, 32>}]} {
    %c0 = arith.constant 0 : index
    %c0_0 = arith.constant 0 : index
    %c0_1 = arith.constant 0 : index
    %0 = vector.load %arg2[%c0, %c0_0, %c0_1] : memref<1x8x32xf32, #tpu.memory_space<vmem>>, vector<1x8x32xf32>
    %1 = vector.shape_cast %0 : vector<1x8x32xf32> to vector<8x32xf32>
    %c0_2 = arith.constant 0 : index
    %c0_3 = arith.constant 0 : index
    %2 = vector.load %arg3[%c0_2, %c0_3] : memref<1x32xf32, #tpu.memory_space<vmem>>, vector<1x32xf32>
    %c0_4 = arith.constant 0 : index
    %c0_5 = arith.constant 0 : index
    %3 = vector.load %arg4[%c0_4, %c0_5] : memref<1x32xf32, #tpu.memory_space<vmem>>, vector<1x32xf32>
    %cst = arith.constant dense<0.000000e+00> : vector<8xf32>
    %4 = vector.multi_reduction <add>, %1, %cst [1] : vector<8x32xf32> to vector<8xf32>
    %5 = vector.shape_cast %4 : vector<8xf32> to vector<8x1xf32>
    %cst_6 = arith.constant 3.200000e+01 : f32
    %6 = vector.broadcast %cst_6 : f32 to vector<8x1xf32>
    %7 = arith.divf %5, %6 : vector<8x1xf32>
    %8 = vector.broadcast %7 : vector<8x1xf32> to vector<8x32xf32>
    %9 = arith.subf %1, %8 : vector<8x32xf32>
    %10 = arith.mulf %9, %9 : vector<8x32xf32>
    %cst_7 = arith.constant dense<0.000000e+00> : vector<8xf32>
    %11 = vector.multi_reduction <add>, %10, %cst_7 [1] : vector<8x32xf32> to vector<8xf32>
    %12 = vector.shape_cast %11 : vector<8xf32> to vector<8x1xf32>
    %cst_8 = arith.constant 3.200000e+01 : f32
    %13 = vector.broadcast %cst_8 : f32 to vector<8x1xf32>
    %14 = arith.divf %12, %13 : vector<8x1xf32>
    %15 = vector.broadcast %7 : vector<8x1xf32> to vector<8x32xf32>
    %16 = arith.subf %1, %15 : vector<8x32xf32>
    %cst_9 = arith.constant 9.99999974E-6 : f32
    %17 = vector.broadcast %cst_9 : f32 to vector<8x1xf32>
    %18 = arith.addf %14, %17 : vector<8x1xf32>
    %19 = math.rsqrt %18 : vector<8x1xf32>
    %20 = vector.broadcast %19 : vector<8x1xf32> to vector<8x32xf32>
    %21 = arith.mulf %16, %20 : vector<8x32xf32>
    %22 = vector.broadcast %2 : vector<1x32xf32> to vector<8x32xf32>
    %23 = arith.mulf %21, %22 : vector<8x32xf32>
    %24 = vector.broadcast %3 : vector<1x32xf32> to vector<8x32xf32>
    %25 = arith.addf %23, %24 : vector<8x32xf32>
    %26 = arith.truncf %25 : vector<8x32xf32> to vector<8x32xbf16>
    %c0_10 = arith.constant 0 : index
    %c0_11 = arith.constant 0 : index
    %27 = vector.load %arg5[%c0_10, %c0_11] : memref<32x96xbf16, #tpu.memory_space<vmem>>, vector<32x96xbf16>
    %cst_12 = arith.constant dense<0.000000e+00> : vector<8x96xf32>
    %28 = tpu.matmul %26, %27, %cst_12 {dimension_numbers = #tpu.dot_dimension_numbers<[1], [0], [0], [1], [0, 0, 1, 1], [], []>} : vector<8x32xbf16>, vector<32x96xbf16>, vector<8x96xf32> -> vector<8x96xf32>
    %c0_13 = arith.constant 0 : index
    %c0_14 = arith.constant 0 : index
    %29 = vector.load %arg6[%c0_13, %c0_14] : memref<1x96xf32, #tpu.memory_space<vmem>>, vector<1x96xf32>
    %30 = vector.broadcast %29 : vector<1x96xf32> to vector<8x96xf32>
    %31 = arith.addf %28, %30 : vector<8x96xf32>
    %32 = vector.extract_strided_slice %31 {offsets = [0, 0], sizes = [8, 32], strides = [1, 1]} : vector<8x96xf32> to vector<8x32xf32>
    %cst_15 = arith.constant 0.353553385 : f32
    %33 = vector.broadcast %cst_15 : f32 to vector<8x32xf32>
    %34 = arith.mulf %32, %33 : vector<8x32xf32>
    %35 = arith.truncf %34 : vector<8x32xf32> to vector<8x32xbf16>
    %c8_i32 = arith.constant 8 : i32
    %36 = arith.muli %arg1, %c8_i32 : i32
    %37 = tpu.assume_multiple %36, 8 : i32
    %38 = vector.extract_strided_slice %31 {offsets = [0, 32], sizes = [8, 32], strides = [1, 1]} : vector<8x96xf32> to vector<8x32xf32>
    %39 = arith.truncf %38 : vector<8x32xf32> to vector<8x32xbf16>
    %40 = arith.index_cast %37 : i32 to index
    %c0_16 = arith.constant 0 : index
    %41 = vector.load %arg16[%40, %c0_16] : memref<8x32xbf16, #tpu.memory_space<vmem>>, vector<8x32xbf16>
    tpu.vector_store %arg16[%40, %c0_16], %39 {strides = array<i32>} : memref<8x32xbf16, #tpu.memory_space<vmem>>, vector<8x32xbf16>,
    %42 = vector.extract_strided_slice %31 {offsets = [0, 64], sizes = [8, 32], strides = [1, 1]} : vector<8x96xf32> to vector<8x32xf32>
    %43 = arith.truncf %42 : vector<8x32xf32> to vector<8x32xbf16>
    %44 = arith.index_cast %37 : i32 to index
    %c0_17 = arith.constant 0 : index
    %45 = vector.load %arg17[%44, %c0_17] : memref<8x32xbf16, #tpu.memory_space<vmem>>, vector<8x32xbf16>
    tpu.vector_store %arg17[%44, %c0_17], %43 {strides = array<i32>} : memref<8x32xbf16, #tpu.memory_space<vmem>>, vector<8x32xbf16>,
    %46 = tpu.iota {dimensions = array<i32: 0>} : vector<8x8xi32>
    %47 = tpu.iota {dimensions = array<i32: 1>} : vector<8x8xi32>
    %48 = arith.cmpi sge, %46, %47 : vector<8x8xi32>
    %c1_i32 = arith.constant 1 : i32
    %49 = arith.addi %arg1, %c1_i32 : i32
    %50 = vector.extract_strided_slice %35 {offsets = [0, 0], sizes = [8, 8], strides = [1, 1]} : vector<8x32xbf16> to vector<8x8xbf16>
    %cst_18 = arith.constant -1.000000e+30 : f32
    %51 = vector.broadcast %cst_18 : f32 to vector<8x1xf32>
    %c0_19 = arith.constant 0 : index
    %c0_20 = arith.constant 0 : index
    %52 = vector.load %arg19[%c0_19, %c0_20] : memref<8x1xf32, #tpu.memory_space<vmem>>, vector<8x1xf32>
    tpu.vector_store %arg19[%c0_19, %c0_20], %51 {strides = array<i32>} : memref<8x1xf32, #tpu.memory_space<vmem>>, vector<8x1xf32>,
    %cst_21 = arith.constant 0.000000e+00 : f32
    %53 = vector.broadcast %cst_21 : f32 to vector<8x1xf32>
    %c0_22 = arith.constant 0 : index
    %c0_23 = arith.constant 0 : index
    %54 = vector.load %arg20[%c0_22, %c0_23] : memref<8x1xf32, #tpu.memory_space<vmem>>, vector<8x1xf32>
    tpu.vector_store %arg20[%c0_22, %c0_23], %53 {strides = array<i32>} : memref<8x1xf32, #tpu.memory_space<vmem>>, vector<8x1xf32>,
    %cst_24 = arith.constant 0.000000e+00 : f32
    %55 = vector.broadcast %cst_24 : f32 to vector<8x8xf32>
    %c0_25 = arith.constant 0 : index
    %c0_26 = arith.constant 0 : index
    %56 = vector.load %arg21[%c0_25, %c0_26] : memref<8x8xf32, #tpu.memory_space<vmem>>, vector<8x8xf32>
    tpu.vector_store %arg21[%c0_25, %c0_26], %55 {strides = array<i32>} : memref<8x8xf32, #tpu.memory_space<vmem>>, vector<8x8xf32>,
    %c0_i32 = arith.constant 0 : i32
    %57 = arith.subi %49, %c0_i32 : i32
    %c1_i32_27 = arith.constant 1 : i32
    %c1_i32_28 = arith.constant 1 : i32
    %58 = arith.subi %c1_i32_27, %c1_i32_28 : i32
    %59 = arith.addi %57, %58 : i32
    %c1_i32_29 = arith.constant 1 : i32
    %60 = arith.divsi %59, %c1_i32_29 : i32
    %c1_i32_30 = arith.constant 1 : i32
    %c0_i32_31 = arith.constant 0 : i32
    %c0_i32_32 = arith.constant 0 : i32
    %61 = arith.subi %60, %c0_i32_32 : i32
    %62 = arith.addi %c0_i32_32, %61 : i32
    %c1_i32_33 = arith.constant 1 : i32
    scf.for %arg22 = %c0_i32_32 to %62 step %c1_i32_33  : i32 {
      %192 = arith.muli %arg22, %c1_i32_30 : i32
      %193 = arith.addi %c0_i32_31, %192 : i32
      %c8_i32_140 = arith.constant 8 : i32
      %194 = arith.muli %193, %c8_i32_140 : i32
      %195 = tpu.assume_multiple %194, 8 : i32
      %196 = arith.index_cast %195 : i32 to index
      %c0_141 = arith.constant 0 : index
      %197 = vector.load %arg16[%196, %c0_141] : memref<8x32xbf16, #tpu.memory_space<vmem>>, vector<8x8xbf16>
      %198 = arith.index_cast %195 : i32 to index
      %c0_142 = arith.constant 0 : index
      %199 = vector.load %arg17[%198, %c0_142] : memref<8x32xbf16, #tpu.memory_space<vmem>>, vector<8x8xbf16>
      %cst_143 = arith.constant dense<0.000000e+00> : vector<8x8xf32>
      %200 = tpu.matmul %50, %197, %cst_143 {dimension_numbers = #tpu.dot_dimension_numbers<[1], [1], [0], [0], [0, 0, 1, 0], [], []>} : vector<8x8xbf16>, vector<8x8xbf16>, vector<8x8xf32> -> vector<8x8xf32>
      %201 = arith.cmpi slt, %193, %arg1 : i32
      %202 = vector.broadcast %201 : i1 to vector<8x8xi1>
      %203 = arith.ori %202, %48 : vector<8x8xi1>
      %cst_144 = arith.constant -1.000000e+30 : f32
      %204 = vector.broadcast %cst_144 : f32 to vector<8x8xf32>
      %205 = arith.select %203, %200, %204 : vector<8x8xi1>, vector<8x8xf32>
      %c0_145 = arith.constant 0 : index
      %c0_146 = arith.constant 0 : index
      %206 = vector.load %arg19[%c0_145, %c0_146] : memref<8x1xf32, #tpu.memory_space<vmem>>, vector<8x1xf32>
      %cst_147 = arith.constant dense<0xFF800000> : vector<8xf32>
      %207 = vector.multi_reduction <maximumf>, %205, %cst_147 [1] : vector<8x8xf32> to vector<8xf32>
      %208 = vector.shape_cast %207 : vector<8xf32> to vector<8x1xf32>
      %209 = arith.maximumf %206, %208 : vector<8x1xf32>
      %210 = arith.subf %206, %209 : vector<8x1xf32>
      %211 = math.exp %210 : vector<8x1xf32>
      %212 = vector.broadcast %209 : vector<8x1xf32> to vector<8x8xf32>
      %213 = arith.subf %205, %212 : vector<8x8xf32>
      %214 = math.exp %213 : vector<8x8xf32>
      %c0_148 = arith.constant 0 : index
      %c0_149 = arith.constant 0 : index
      %215 = vector.load %arg20[%c0_148, %c0_149] : memref<8x1xf32, #tpu.memory_space<vmem>>, vector<8x1xf32>
      %216 = arith.mulf %211, %215 : vector<8x1xf32>
      %cst_150 = arith.constant dense<0.000000e+00> : vector<8xf32>
      %217 = vector.multi_reduction <add>, %214, %cst_150 [1] : vector<8x8xf32> to vector<8xf32>
      %218 = vector.shape_cast %217 : vector<8xf32> to vector<8x1xf32>
      %219 = arith.addf %216, %218 : vector<8x1xf32>
      %c0_151 = arith.constant 0 : index
      %c0_152 = arith.constant 0 : index
      %220 = vector.load %arg20[%c0_151, %c0_152] : memref<8x1xf32, #tpu.memory_space<vmem>>, vector<8x1xf32>
      tpu.vector_store %arg20[%c0_151, %c0_152], %219 {strides = array<i32>} : memref<8x1xf32, #tpu.memory_space<vmem>>, vector<8x1xf32>,
      %c0_153 = arith.constant 0 : index
      %c0_154 = arith.constant 0 : index
      %221 = vector.load %arg21[%c0_153, %c0_154] : memref<8x8xf32, #tpu.memory_space<vmem>>, vector<8x8xf32>
      %222 = vector.broadcast %211 : vector<8x1xf32> to vector<8x8xf32>
      %223 = arith.mulf %222, %221 : vector<8x8xf32>
      %224 = arith.truncf %214 : vector<8x8xf32> to vector<8x8xbf16>
      %cst_155 = arith.constant dense<0.000000e+00> : vector<8x8xf32>
      %225 = tpu.matmul %224, %199, %cst_155 {dimension_numbers = #tpu.dot_dimension_numbers<[1], [0], [0], [1], [0, 0, 1, 1], [], []>} : vector<8x8xbf16>, vector<8x8xbf16>, vector<8x8xf32> -> vector<8x8xf32>
      %226 = arith.addf %223, %225 : vector<8x8xf32>
      %c0_156 = arith.constant 0 : index
      %c0_157 = arith.constant 0 : index
      %227 = vector.load %arg21[%c0_156, %c0_157] : memref<8x8xf32, #tpu.memory_space<vmem>>, vector<8x8xf32>
      tpu.vector_store %arg21[%c0_156, %c0_157], %226 {strides = array<i32>} : memref<8x8xf32, #tpu.memory_space<vmem>>, vector<8x8xf32>,
      %c0_158 = arith.constant 0 : index
      %c0_159 = arith.constant 0 : index
      %228 = vector.load %arg19[%c0_158, %c0_159] : memref<8x1xf32, #tpu.memory_space<vmem>>, vector<8x1xf32>
      tpu.vector_store %arg19[%c0_158, %c0_159], %209 {strides = array<i32>} : memref<8x1xf32, #tpu.memory_space<vmem>>, vector<8x1xf32>,
    }
    %c0_34 = arith.constant 0 : index
    %c0_35 = arith.constant 0 : index
    %63 = vector.load %arg20[%c0_34, %c0_35] : memref<8x1xf32, #tpu.memory_space<vmem>>, vector<8x1xf32>
    %64 = tpu.reciprocal %63 {approx = true} : vector<8x1xf32> -> vector<8x1xf32>
    %c0_36 = arith.constant 0 : index
    %c0_37 = arith.constant 0 : index
    %65 = vector.load %arg21[%c0_36, %c0_37] : memref<8x8xf32, #tpu.memory_space<vmem>>, vector<8x8xf32>
    %66 = vector.broadcast %64 : vector<8x1xf32> to vector<8x8xf32>
    %67 = arith.mulf %65, %66 : vector<8x8xf32>
    %68 = arith.truncf %67 : vector<8x8xf32> to vector<8x8xbf16>
    %c0_38 = arith.constant 0 : index
    %c0_39 = arith.constant 0 : index
    %69 = vector.load %arg18[%c0_38, %c0_39] : memref<8x32xbf16, #tpu.memory_space<vmem>>, vector<8x8xbf16>
    tpu.vector_store %arg18[%c0_38, %c0_39], %68 {strides = array<i32>} : memref<8x32xbf16, #tpu.memory_space<vmem>>, vector<8x8xbf16>,
    %70 = vector.extract_strided_slice %35 {offsets = [0, 8], sizes = [8, 8], strides = [1, 1]} : vector<8x32xbf16> to vector<8x8xbf16>
    %cst_40 = arith.constant -1.000000e+30 : f32
    %71 = vector.broadcast %cst_40 : f32 to vector<8x1xf32>
    %c0_41 = arith.constant 0 : index
    %c0_42 = arith.constant 0 : index
    %72 = vector.load %arg19[%c0_41, %c0_42] : memref<8x1xf32, #tpu.memory_space<vmem>>, vector<8x1xf32>
    tpu.vector_store %arg19[%c0_41, %c0_42], %71 {strides = array<i32>} : memref<8x1xf32, #tpu.memory_space<vmem>>, vector<8x1xf32>,
    %cst_43 = arith.constant 0.000000e+00 : f32
    %73 = vector.broadcast %cst_43 : f32 to vector<8x1xf32>
    %c0_44 = arith.constant 0 : index
    %c0_45 = arith.constant 0 : index
    %74 = vector.load %arg20[%c0_44, %c0_45] : memref<8x1xf32, #tpu.memory_space<vmem>>, vector<8x1xf32>
    tpu.vector_store %arg20[%c0_44, %c0_45], %73 {strides = array<i32>} : memref<8x1xf32, #tpu.memory_space<vmem>>, vector<8x1xf32>,
    %cst_46 = arith.constant 0.000000e+00 : f32
    %75 = vector.broadcast %cst_46 : f32 to vector<8x8xf32>
    %c0_47 = arith.constant 0 : index
    %c0_48 = arith.constant 0 : index
    %76 = vector.load %arg21[%c0_47, %c0_48] : memref<8x8xf32, #tpu.memory_space<vmem>>, vector<8x8xf32>
    tpu.vector_store %arg21[%c0_47, %c0_48], %75 {strides = array<i32>} : memref<8x8xf32, #tpu.memory_space<vmem>>, vector<8x8xf32>,
    %c0_i32_49 = arith.constant 0 : i32
    %77 = arith.subi %49, %c0_i32_49 : i32
    %c1_i32_50 = arith.constant 1 : i32
    %c1_i32_51 = arith.constant 1 : i32
    %78 = arith.subi %c1_i32_50, %c1_i32_51 : i32
    %79 = arith.addi %77, %78 : i32
    %c1_i32_52 = arith.constant 1 : i32
    %80 = arith.divsi %79, %c1_i32_52 : i32
    %c1_i32_53 = arith.constant 1 : i32
    %c0_i32_54 = arith.constant 0 : i32
    %c0_i32_55 = arith.constant 0 : i32
    %81 = arith.subi %80, %c0_i32_55 : i32
    %82 = arith.addi %c0_i32_55, %81 : i32
    %c1_i32_56 = arith.constant 1 : i32
    scf.for %arg22 = %c0_i32_55 to %82 step %c1_i32_56  : i32 {
      %192 = arith.muli %arg22, %c1_i32_53 : i32
      %193 = arith.addi %c0_i32_54, %192 : i32
      %c8_i32_140 = arith.constant 8 : i32
      %194 = arith.muli %193, %c8_i32_140 : i32
      %195 = tpu.assume_multiple %194, 8 : i32
      %196 = arith.index_cast %195 : i32 to index
      %c8_141 = arith.constant 8 : index
      %197 = vector.load %arg16[%196, %c8_141] : memref<8x32xbf16, #tpu.memory_space<vmem>>, vector<8x8xbf16>
      %198 = arith.index_cast %195 : i32 to index
      %c8_142 = arith.constant 8 : index
      %199 = vector.load %arg17[%198, %c8_142] : memref<8x32xbf16, #tpu.memory_space<vmem>>, vector<8x8xbf16>
      %cst_143 = arith.constant dense<0.000000e+00> : vector<8x8xf32>
      %200 = tpu.matmul %70, %197, %cst_143 {dimension_numbers = #tpu.dot_dimension_numbers<[1], [1], [0], [0], [0, 0, 1, 0], [], []>} : vector<8x8xbf16>, vector<8x8xbf16>, vector<8x8xf32> -> vector<8x8xf32>
      %201 = arith.cmpi slt, %193, %arg1 : i32
      %202 = vector.broadcast %201 : i1 to vector<8x8xi1>
      %203 = arith.ori %202, %48 : vector<8x8xi1>
      %cst_144 = arith.constant -1.000000e+30 : f32
      %204 = vector.broadcast %cst_144 : f32 to vector<8x8xf32>
      %205 = arith.select %203, %200, %204 : vector<8x8xi1>, vector<8x8xf32>
      %c0_145 = arith.constant 0 : index
      %c0_146 = arith.constant 0 : index
      %206 = vector.load %arg19[%c0_145, %c0_146] : memref<8x1xf32, #tpu.memory_space<vmem>>, vector<8x1xf32>
      %cst_147 = arith.constant dense<0xFF800000> : vector<8xf32>
      %207 = vector.multi_reduction <maximumf>, %205, %cst_147 [1] : vector<8x8xf32> to vector<8xf32>
      %208 = vector.shape_cast %207 : vector<8xf32> to vector<8x1xf32>
      %209 = arith.maximumf %206, %208 : vector<8x1xf32>
      %210 = arith.subf %206, %209 : vector<8x1xf32>
      %211 = math.exp %210 : vector<8x1xf32>
      %212 = vector.broadcast %209 : vector<8x1xf32> to vector<8x8xf32>
      %213 = arith.subf %205, %212 : vector<8x8xf32>
      %214 = math.exp %213 : vector<8x8xf32>
      %c0_148 = arith.constant 0 : index
      %c0_149 = arith.constant 0 : index
      %215 = vector.load %arg20[%c0_148, %c0_149] : memref<8x1xf32, #tpu.memory_space<vmem>>, vector<8x1xf32>
      %216 = arith.mulf %211, %215 : vector<8x1xf32>
      %cst_150 = arith.constant dense<0.000000e+00> : vector<8xf32>
      %217 = vector.multi_reduction <add>, %214, %cst_150 [1] : vector<8x8xf32> to vector<8xf32>
      %218 = vector.shape_cast %217 : vector<8xf32> to vector<8x1xf32>
      %219 = arith.addf %216, %218 : vector<8x1xf32>
      %c0_151 = arith.constant 0 : index
      %c0_152 = arith.constant 0 : index
      %220 = vector.load %arg20[%c0_151, %c0_152] : memref<8x1xf32, #tpu.memory_space<vmem>>, vector<8x1xf32>
      tpu.vector_store %arg20[%c0_151, %c0_152], %219 {strides = array<i32>} : memref<8x1xf32, #tpu.memory_space<vmem>>, vector<8x1xf32>,
      %c0_153 = arith.constant 0 : index
      %c0_154 = arith.constant 0 : index
      %221 = vector.load %arg21[%c0_153, %c0_154] : memref<8x8xf32, #tpu.memory_space<vmem>>, vector<8x8xf32>
      %222 = vector.broadcast %211 : vector<8x1xf32> to vector<8x8xf32>
      %223 = arith.mulf %222, %221 : vector<8x8xf32>
      %224 = arith.truncf %214 : vector<8x8xf32> to vector<8x8xbf16>
      %cst_155 = arith.constant dense<0.000000e+00> : vector<8x8xf32>
      %225 = tpu.matmul %224, %199, %cst_155 {dimension_numbers = #tpu.dot_dimension_numbers<[1], [0], [0], [1], [0, 0, 1, 1], [], []>} : vector<8x8xbf16>, vector<8x8xbf16>, vector<8x8xf32> -> vector<8x8xf32>
      %226 = arith.addf %223, %225 : vector<8x8xf32>
      %c0_156 = arith.constant 0 : index
      %c0_157 = arith.constant 0 : index
      %227 = vector.load %arg21[%c0_156, %c0_157] : memref<8x8xf32, #tpu.memory_space<vmem>>, vector<8x8xf32>
      tpu.vector_store %arg21[%c0_156, %c0_157], %226 {strides = array<i32>} : memref<8x8xf32, #tpu.memory_space<vmem>>, vector<8x8xf32>,
      %c0_158 = arith.constant 0 : index
      %c0_159 = arith.constant 0 : index
      %228 = vector.load %arg19[%c0_158, %c0_159] : memref<8x1xf32, #tpu.memory_space<vmem>>, vector<8x1xf32>
      tpu.vector_store %arg19[%c0_158, %c0_159], %209 {strides = array<i32>} : memref<8x1xf32, #tpu.memory_space<vmem>>, vector<8x1xf32>,
    }
    %c0_57 = arith.constant 0 : index
    %c0_58 = arith.constant 0 : index
    %83 = vector.load %arg20[%c0_57, %c0_58] : memref<8x1xf32, #tpu.memory_space<vmem>>, vector<8x1xf32>
    %84 = tpu.reciprocal %83 {approx = true} : vector<8x1xf32> -> vector<8x1xf32>
    %c0_59 = arith.constant 0 : index
    %c0_60 = arith.constant 0 : index
    %85 = vector.load %arg21[%c0_59, %c0_60] : memref<8x8xf32, #tpu.memory_space<vmem>>, vector<8x8xf32>
    %86 = vector.broadcast %84 : vector<8x1xf32> to vector<8x8xf32>
    %87 = arith.mulf %85, %86 : vector<8x8xf32>
    %88 = arith.truncf %87 : vector<8x8xf32> to vector<8x8xbf16>
    %c0_61 = arith.constant 0 : index
    %c8 = arith.constant 8 : index
    %89 = vector.load %arg18[%c0_61, %c8] : memref<8x32xbf16, #tpu.memory_space<vmem>>, vector<8x8xbf16>
    tpu.vector_store %arg18[%c0_61, %c8], %88 {strides = array<i32>} : memref<8x32xbf16, #tpu.memory_space<vmem>>, vector<8x8xbf16>,
    %90 = vector.extract_strided_slice %35 {offsets = [0, 16], sizes = [8, 8], strides = [1, 1]} : vector<8x32xbf16> to vector<8x8xbf16>
    %cst_62 = arith.constant -1.000000e+30 : f32
    %91 = vector.broadcast %cst_62 : f32 to vector<8x1xf32>
    %c0_63 = arith.constant 0 : index
    %c0_64 = arith.constant 0 : index
    %92 = vector.load %arg19[%c0_63, %c0_64] : memref<8x1xf32, #tpu.memory_space<vmem>>, vector<8x1xf32>
    tpu.vector_store %arg19[%c0_63, %c0_64], %91 {strides = array<i32>} : memref<8x1xf32, #tpu.memory_space<vmem>>, vector<8x1xf32>,
    %cst_65 = arith.constant 0.000000e+00 : f32
    %93 = vector.broadcast %cst_65 : f32 to vector<8x1xf32>
    %c0_66 = arith.constant 0 : index
    %c0_67 = arith.constant 0 : index
    %94 = vector.load %arg20[%c0_66, %c0_67] : memref<8x1xf32, #tpu.memory_space<vmem>>, vector<8x1xf32>
    tpu.vector_store %arg20[%c0_66, %c0_67], %93 {strides = array<i32>} : memref<8x1xf32, #tpu.memory_space<vmem>>, vector<8x1xf32>,
    %cst_68 = arith.constant 0.000000e+00 : f32
    %95 = vector.broadcast %cst_68 : f32 to vector<8x8xf32>
    %c0_69 = arith.constant 0 : index
    %c0_70 = arith.constant 0 : index
    %96 = vector.load %arg21[%c0_69, %c0_70] : memref<8x8xf32, #tpu.memory_space<vmem>>, vector<8x8xf32>
    tpu.vector_store %arg21[%c0_69, %c0_70], %95 {strides = array<i32>} : memref<8x8xf32, #tpu.memory_space<vmem>>, vector<8x8xf32>,
    %c0_i32_71 = arith.constant 0 : i32
    %97 = arith.subi %49, %c0_i32_71 : i32
    %c1_i32_72 = arith.constant 1 : i32
    %c1_i32_73 = arith.constant 1 : i32
    %98 = arith.subi %c1_i32_72, %c1_i32_73 : i32
    %99 = arith.addi %97, %98 : i32
    %c1_i32_74 = arith.constant 1 : i32
    %100 = arith.divsi %99, %c1_i32_74 : i32
    %c1_i32_75 = arith.constant 1 : i32
    %c0_i32_76 = arith.constant 0 : i32
    %c0_i32_77 = arith.constant 0 : i32
    %101 = arith.subi %100, %c0_i32_77 : i32
    %102 = arith.addi %c0_i32_77, %101 : i32
    %c1_i32_78 = arith.constant 1 : i32
    scf.for %arg22 = %c0_i32_77 to %102 step %c1_i32_78  : i32 {
      %192 = arith.muli %arg22, %c1_i32_75 : i32
      %193 = arith.addi %c0_i32_76, %192 : i32
      %c8_i32_140 = arith.constant 8 : i32
      %194 = arith.muli %193, %c8_i32_140 : i32
      %195 = tpu.assume_multiple %194, 8 : i32
      %196 = arith.index_cast %195 : i32 to index
      %c16_141 = arith.constant 16 : index
      %197 = vector.load %arg16[%196, %c16_141] : memref<8x32xbf16, #tpu.memory_space<vmem>>, vector<8x8xbf16>
      %198 = arith.index_cast %195 : i32 to index
      %c16_142 = arith.constant 16 : index
      %199 = vector.load %arg17[%198, %c16_142] : memref<8x32xbf16, #tpu.memory_space<vmem>>, vector<8x8xbf16>
      %cst_143 = arith.constant dense<0.000000e+00> : vector<8x8xf32>
      %200 = tpu.matmul %90, %197, %cst_143 {dimension_numbers = #tpu.dot_dimension_numbers<[1], [1], [0], [0], [0, 0, 1, 0], [], []>} : vector<8x8xbf16>, vector<8x8xbf16>, vector<8x8xf32> -> vector<8x8xf32>
      %201 = arith.cmpi slt, %193, %arg1 : i32
      %202 = vector.broadcast %201 : i1 to vector<8x8xi1>
      %203 = arith.ori %202, %48 : vector<8x8xi1>
      %cst_144 = arith.constant -1.000000e+30 : f32
      %204 = vector.broadcast %cst_144 : f32 to vector<8x8xf32>
      %205 = arith.select %203, %200, %204 : vector<8x8xi1>, vector<8x8xf32>
      %c0_145 = arith.constant 0 : index
      %c0_146 = arith.constant 0 : index
      %206 = vector.load %arg19[%c0_145, %c0_146] : memref<8x1xf32, #tpu.memory_space<vmem>>, vector<8x1xf32>
      %cst_147 = arith.constant dense<0xFF800000> : vector<8xf32>
      %207 = vector.multi_reduction <maximumf>, %205, %cst_147 [1] : vector<8x8xf32> to vector<8xf32>
      %208 = vector.shape_cast %207 : vector<8xf32> to vector<8x1xf32>
      %209 = arith.maximumf %206, %208 : vector<8x1xf32>
      %210 = arith.subf %206, %209 : vector<8x1xf32>
      %211 = math.exp %210 : vector<8x1xf32>
      %212 = vector.broadcast %209 : vector<8x1xf32> to vector<8x8xf32>
      %213 = arith.subf %205, %212 : vector<8x8xf32>
      %214 = math.exp %213 : vector<8x8xf32>
      %c0_148 = arith.constant 0 : index
      %c0_149 = arith.constant 0 : index
      %215 = vector.load %arg20[%c0_148, %c0_149] : memref<8x1xf32, #tpu.memory_space<vmem>>, vector<8x1xf32>
      %216 = arith.mulf %211, %215 : vector<8x1xf32>
      %cst_150 = arith.constant dense<0.000000e+00> : vector<8xf32>
      %217 = vector.multi_reduction <add>, %214, %cst_150 [1] : vector<8x8xf32> to vector<8xf32>
      %218 = vector.shape_cast %217 : vector<8xf32> to vector<8x1xf32>
      %219 = arith.addf %216, %218 : vector<8x1xf32>
      %c0_151 = arith.constant 0 : index
      %c0_152 = arith.constant 0 : index
      %220 = vector.load %arg20[%c0_151, %c0_152] : memref<8x1xf32, #tpu.memory_space<vmem>>, vector<8x1xf32>
      tpu.vector_store %arg20[%c0_151, %c0_152], %219 {strides = array<i32>} : memref<8x1xf32, #tpu.memory_space<vmem>>, vector<8x1xf32>,
      %c0_153 = arith.constant 0 : index
      %c0_154 = arith.constant 0 : index
      %221 = vector.load %arg21[%c0_153, %c0_154] : memref<8x8xf32, #tpu.memory_space<vmem>>, vector<8x8xf32>
      %222 = vector.broadcast %211 : vector<8x1xf32> to vector<8x8xf32>
      %223 = arith.mulf %222, %221 : vector<8x8xf32>
      %224 = arith.truncf %214 : vector<8x8xf32> to vector<8x8xbf16>
      %cst_155 = arith.constant dense<0.000000e+00> : vector<8x8xf32>
      %225 = tpu.matmul %224, %199, %cst_155 {dimension_numbers = #tpu.dot_dimension_numbers<[1], [0], [0], [1], [0, 0, 1, 1], [], []>} : vector<8x8xbf16>, vector<8x8xbf16>, vector<8x8xf32> -> vector<8x8xf32>
      %226 = arith.addf %223, %225 : vector<8x8xf32>
      %c0_156 = arith.constant 0 : index
      %c0_157 = arith.constant 0 : index
      %227 = vector.load %arg21[%c0_156, %c0_157] : memref<8x8xf32, #tpu.memory_space<vmem>>, vector<8x8xf32>
      tpu.vector_store %arg21[%c0_156, %c0_157], %226 {strides = array<i32>} : memref<8x8xf32, #tpu.memory_space<vmem>>, vector<8x8xf32>,
      %c0_158 = arith.constant 0 : index
      %c0_159 = arith.constant 0 : index
      %228 = vector.load %arg19[%c0_158, %c0_159] : memref<8x1xf32, #tpu.memory_space<vmem>>, vector<8x1xf32>
      tpu.vector_store %arg19[%c0_158, %c0_159], %209 {strides = array<i32>} : memref<8x1xf32, #tpu.memory_space<vmem>>, vector<8x1xf32>,
    }
    %c0_79 = arith.constant 0 : index
    %c0_80 = arith.constant 0 : index
    %103 = vector.load %arg20[%c0_79, %c0_80] : memref<8x1xf32, #tpu.memory_space<vmem>>, vector<8x1xf32>
    %104 = tpu.reciprocal %103 {approx = true} : vector<8x1xf32> -> vector<8x1xf32>
    %c0_81 = arith.constant 0 : index
    %c0_82 = arith.constant 0 : index
    %105 = vector.load %arg21[%c0_81, %c0_82] : memref<8x8xf32, #tpu.memory_space<vmem>>, vector<8x8xf32>
    %106 = vector.broadcast %104 : vector<8x1xf32> to vector<8x8xf32>
    %107 = arith.mulf %105, %106 : vector<8x8xf32>
    %108 = arith.truncf %107 : vector<8x8xf32> to vector<8x8xbf16>
    %c0_83 = arith.constant 0 : index
    %c16 = arith.constant 16 : index
    %109 = vector.load %arg18[%c0_83, %c16] : memref<8x32xbf16, #tpu.memory_space<vmem>>, vector<8x8xbf16>
    tpu.vector_store %arg18[%c0_83, %c16], %108 {strides = array<i32>} : memref<8x32xbf16, #tpu.memory_space<vmem>>, vector<8x8xbf16>,
    %110 = vector.extract_strided_slice %35 {offsets = [0, 24], sizes = [8, 8], strides = [1, 1]} : vector<8x32xbf16> to vector<8x8xbf16>
    %cst_84 = arith.constant -1.000000e+30 : f32
    %111 = vector.broadcast %cst_84 : f32 to vector<8x1xf32>
    %c0_85 = arith.constant 0 : index
    %c0_86 = arith.constant 0 : index
    %112 = vector.load %arg19[%c0_85, %c0_86] : memref<8x1xf32, #tpu.memory_space<vmem>>, vector<8x1xf32>
    tpu.vector_store %arg19[%c0_85, %c0_86], %111 {strides = array<i32>} : memref<8x1xf32, #tpu.memory_space<vmem>>, vector<8x1xf32>,
    %cst_87 = arith.constant 0.000000e+00 : f32
    %113 = vector.broadcast %cst_87 : f32 to vector<8x1xf32>
    %c0_88 = arith.constant 0 : index
    %c0_89 = arith.constant 0 : index
    %114 = vector.load %arg20[%c0_88, %c0_89] : memref<8x1xf32, #tpu.memory_space<vmem>>, vector<8x1xf32>
    tpu.vector_store %arg20[%c0_88, %c0_89], %113 {strides = array<i32>} : memref<8x1xf32, #tpu.memory_space<vmem>>, vector<8x1xf32>,
    %cst_90 = arith.constant 0.000000e+00 : f32
    %115 = vector.broadcast %cst_90 : f32 to vector<8x8xf32>
    %c0_91 = arith.constant 0 : index
    %c0_92 = arith.constant 0 : index
    %116 = vector.load %arg21[%c0_91, %c0_92] : memref<8x8xf32, #tpu.memory_space<vmem>>, vector<8x8xf32>
    tpu.vector_store %arg21[%c0_91, %c0_92], %115 {strides = array<i32>} : memref<8x8xf32, #tpu.memory_space<vmem>>, vector<8x8xf32>,
    %c0_i32_93 = arith.constant 0 : i32
    %117 = arith.subi %49, %c0_i32_93 : i32
    %c1_i32_94 = arith.constant 1 : i32
    %c1_i32_95 = arith.constant 1 : i32
    %118 = arith.subi %c1_i32_94, %c1_i32_95 : i32
    %119 = arith.addi %117, %118 : i32
    %c1_i32_96 = arith.constant 1 : i32
    %120 = arith.divsi %119, %c1_i32_96 : i32
    %c1_i32_97 = arith.constant 1 : i32
    %c0_i32_98 = arith.constant 0 : i32
    %c0_i32_99 = arith.constant 0 : i32
    %121 = arith.subi %120, %c0_i32_99 : i32
    %122 = arith.addi %c0_i32_99, %121 : i32
    %c1_i32_100 = arith.constant 1 : i32
    scf.for %arg22 = %c0_i32_99 to %122 step %c1_i32_100  : i32 {
      %192 = arith.muli %arg22, %c1_i32_97 : i32
      %193 = arith.addi %c0_i32_98, %192 : i32
      %c8_i32_140 = arith.constant 8 : i32
      %194 = arith.muli %193, %c8_i32_140 : i32
      %195 = tpu.assume_multiple %194, 8 : i32
      %196 = arith.index_cast %195 : i32 to index
      %c24_141 = arith.constant 24 : index
      %197 = vector.load %arg16[%196, %c24_141] : memref<8x32xbf16, #tpu.memory_space<vmem>>, vector<8x8xbf16>
      %198 = arith.index_cast %195 : i32 to index
      %c24_142 = arith.constant 24 : index
      %199 = vector.load %arg17[%198, %c24_142] : memref<8x32xbf16, #tpu.memory_space<vmem>>, vector<8x8xbf16>
      %cst_143 = arith.constant dense<0.000000e+00> : vector<8x8xf32>
      %200 = tpu.matmul %110, %197, %cst_143 {dimension_numbers = #tpu.dot_dimension_numbers<[1], [1], [0], [0], [0, 0, 1, 0], [], []>} : vector<8x8xbf16>, vector<8x8xbf16>, vector<8x8xf32> -> vector<8x8xf32>
      %201 = arith.cmpi slt, %193, %arg1 : i32
      %202 = vector.broadcast %201 : i1 to vector<8x8xi1>
      %203 = arith.ori %202, %48 : vector<8x8xi1>
      %cst_144 = arith.constant -1.000000e+30 : f32
      %204 = vector.broadcast %cst_144 : f32 to vector<8x8xf32>
      %205 = arith.select %203, %200, %204 : vector<8x8xi1>, vector<8x8xf32>
      %c0_145 = arith.constant 0 : index
      %c0_146 = arith.constant 0 : index
      %206 = vector.load %arg19[%c0_145, %c0_146] : memref<8x1xf32, #tpu.memory_space<vmem>>, vector<8x1xf32>
      %cst_147 = arith.constant dense<0xFF800000> : vector<8xf32>
      %207 = vector.multi_reduction <maximumf>, %205, %cst_147 [1] : vector<8x8xf32> to vector<8xf32>
      %208 = vector.shape_cast %207 : vector<8xf32> to vector<8x1xf32>
      %209 = arith.maximumf %206, %208 : vector<8x1xf32>
      %210 = arith.subf %206, %209 : vector<8x1xf32>
      %211 = math.exp %210 : vector<8x1xf32>
      %212 = vector.broadcast %209 : vector<8x1xf32> to vector<8x8xf32>
      %213 = arith.subf %205, %212 : vector<8x8xf32>
      %214 = math.exp %213 : vector<8x8xf32>
      %c0_148 = arith.constant 0 : index
      %c0_149 = arith.constant 0 : index
      %215 = vector.load %arg20[%c0_148, %c0_149] : memref<8x1xf32, #tpu.memory_space<vmem>>, vector<8x1xf32>
      %216 = arith.mulf %211, %215 : vector<8x1xf32>
      %cst_150 = arith.constant dense<0.000000e+00> : vector<8xf32>
      %217 = vector.multi_reduction <add>, %214, %cst_150 [1] : vector<8x8xf32> to vector<8xf32>
      %218 = vector.shape_cast %217 : vector<8xf32> to vector<8x1xf32>
      %219 = arith.addf %216, %218 : vector<8x1xf32>
      %c0_151 = arith.constant 0 : index
      %c0_152 = arith.constant 0 : index
      %220 = vector.load %arg20[%c0_151, %c0_152] : memref<8x1xf32, #tpu.memory_space<vmem>>, vector<8x1xf32>
      tpu.vector_store %arg20[%c0_151, %c0_152], %219 {strides = array<i32>} : memref<8x1xf32, #tpu.memory_space<vmem>>, vector<8x1xf32>,
      %c0_153 = arith.constant 0 : index
      %c0_154 = arith.constant 0 : index
      %221 = vector.load %arg21[%c0_153, %c0_154] : memref<8x8xf32, #tpu.memory_space<vmem>>, vector<8x8xf32>
      %222 = vector.broadcast %211 : vector<8x1xf32> to vector<8x8xf32>
      %223 = arith.mulf %222, %221 : vector<8x8xf32>
      %224 = arith.truncf %214 : vector<8x8xf32> to vector<8x8xbf16>
      %cst_155 = arith.constant dense<0.000000e+00> : vector<8x8xf32>
      %225 = tpu.matmul %224, %199, %cst_155 {dimension_numbers = #tpu.dot_dimension_numbers<[1], [0], [0], [1], [0, 0, 1, 1], [], []>} : vector<8x8xbf16>, vector<8x8xbf16>, vector<8x8xf32> -> vector<8x8xf32>
      %226 = arith.addf %223, %225 : vector<8x8xf32>
      %c0_156 = arith.constant 0 : index
      %c0_157 = arith.constant 0 : index
      %227 = vector.load %arg21[%c0_156, %c0_157] : memref<8x8xf32, #tpu.memory_space<vmem>>, vector<8x8xf32>
      tpu.vector_store %arg21[%c0_156, %c0_157], %226 {strides = array<i32>} : memref<8x8xf32, #tpu.memory_space<vmem>>, vector<8x8xf32>,
      %c0_158 = arith.constant 0 : index
      %c0_159 = arith.constant 0 : index
      %228 = vector.load %arg19[%c0_158, %c0_159] : memref<8x1xf32, #tpu.memory_space<vmem>>, vector<8x1xf32>
      tpu.vector_store %arg19[%c0_158, %c0_159], %209 {strides = array<i32>} : memref<8x1xf32, #tpu.memory_space<vmem>>, vector<8x1xf32>,
    }
    %c0_101 = arith.constant 0 : index
    %c0_102 = arith.constant 0 : index
    %123 = vector.load %arg20[%c0_101, %c0_102] : memref<8x1xf32, #tpu.memory_space<vmem>>, vector<8x1xf32>
    %124 = tpu.reciprocal %123 {approx = true} : vector<8x1xf32> -> vector<8x1xf32>
    %c0_103 = arith.constant 0 : index
    %c0_104 = arith.constant 0 : index
    %125 = vector.load %arg21[%c0_103, %c0_104] : memref<8x8xf32, #tpu.memory_space<vmem>>, vector<8x8xf32>
    %126 = vector.broadcast %124 : vector<8x1xf32> to vector<8x8xf32>
    %127 = arith.mulf %125, %126 : vector<8x8xf32>
    %128 = arith.truncf %127 : vector<8x8xf32> to vector<8x8xbf16>
    %c0_105 = arith.constant 0 : index
    %c24 = arith.constant 24 : index
    %129 = vector.load %arg18[%c0_105, %c24] : memref<8x32xbf16, #tpu.memory_space<vmem>>, vector<8x8xbf16>
    tpu.vector_store %arg18[%c0_105, %c24], %128 {strides = array<i32>} : memref<8x32xbf16, #tpu.memory_space<vmem>>, vector<8x8xbf16>,
    %c0_106 = arith.constant 0 : index
    %c0_107 = arith.constant 0 : index
    %130 = vector.load %arg18[%c0_106, %c0_107] : memref<8x32xbf16, #tpu.memory_space<vmem>>, vector<8x32xbf16>
    %c0_108 = arith.constant 0 : index
    %c0_109 = arith.constant 0 : index
    %131 = vector.load %arg7[%c0_108, %c0_109] : memref<32x32xbf16, #tpu.memory_space<vmem>>, vector<32x32xbf16>
    %cst_110 = arith.constant dense<0.000000e+00> : vector<8x32xf32>
    %132 = tpu.matmul %130, %131, %cst_110 {dimension_numbers = #tpu.dot_dimension_numbers<[1], [0], [0], [1], [0, 0, 1, 1], [], []>} : vector<8x32xbf16>, vector<32x32xbf16>, vector<8x32xf32> -> vector<8x32xf32>
    %c0_111 = arith.constant 0 : index
    %c0_112 = arith.constant 0 : index
    %133 = vector.load %arg8[%c0_111, %c0_112] : memref<1x32xf32, #tpu.memory_space<vmem>>, vector<1x32xf32>
    %134 = vector.broadcast %133 : vector<1x32xf32> to vector<8x32xf32>
    %135 = arith.addf %132, %134 : vector<8x32xf32>
    %136 = arith.addf %1, %135 : vector<8x32xf32>
    %c0_113 = arith.constant 0 : index
    %c0_114 = arith.constant 0 : index
    %137 = vector.load %arg9[%c0_113, %c0_114] : memref<1x32xf32, #tpu.memory_space<vmem>>, vector<1x32xf32>
    %c0_115 = arith.constant 0 : index
    %c0_116 = arith.constant 0 : index
    %138 = vector.load %arg10[%c0_115, %c0_116] : memref<1x32xf32, #tpu.memory_space<vmem>>, vector<1x32xf32>
    %cst_117 = arith.constant dense<0.000000e+00> : vector<8xf32>
    %139 = vector.multi_reduction <add>, %136, %cst_117 [1] : vector<8x32xf32> to vector<8xf32>
    %140 = vector.shape_cast %139 : vector<8xf32> to vector<8x1xf32>
    %cst_118 = arith.constant 3.200000e+01 : f32
    %141 = vector.broadcast %cst_118 : f32 to vector<8x1xf32>
    %142 = arith.divf %140, %141 : vector<8x1xf32>
    %143 = vector.broadcast %142 : vector<8x1xf32> to vector<8x32xf32>
    %144 = arith.subf %136, %143 : vector<8x32xf32>
    %145 = arith.mulf %144, %144 : vector<8x32xf32>
    %cst_119 = arith.constant dense<0.000000e+00> : vector<8xf32>
    %146 = vector.multi_reduction <add>, %145, %cst_119 [1] : vector<8x32xf32> to vector<8xf32>
    %147 = vector.shape_cast %146 : vector<8xf32> to vector<8x1xf32>
    %cst_120 = arith.constant 3.200000e+01 : f32
    %148 = vector.broadcast %cst_120 : f32 to vector<8x1xf32>
    %149 = arith.divf %147, %148 : vector<8x1xf32>
    %150 = vector.broadcast %142 : vector<8x1xf32> to vector<8x32xf32>
    %151 = arith.subf %136, %150 : vector<8x32xf32>
    %cst_121 = arith.constant 9.99999974E-6 : f32
    %152 = vector.broadcast %cst_121 : f32 to vector<8x1xf32>
    %153 = arith.addf %149, %152 : vector<8x1xf32>
    %154 = math.rsqrt %153 : vector<8x1xf32>
    %155 = vector.broadcast %154 : vector<8x1xf32> to vector<8x32xf32>
    %156 = arith.mulf %151, %155 : vector<8x32xf32>
    %157 = vector.broadcast %137 : vector<1x32xf32> to vector<8x32xf32>
    %158 = arith.mulf %156, %157 : vector<8x32xf32>
    %159 = vector.broadcast %138 : vector<1x32xf32> to vector<8x32xf32>
    %160 = arith.addf %158, %159 : vector<8x32xf32>
    %161 = arith.truncf %160 : vector<8x32xf32> to vector<8x32xbf16>
    %cst_122 = arith.constant 0.000000e+00 : f32
    %162 = vector.broadcast %cst_122 : f32 to vector<8x32xf32>
    %c0_123 = arith.constant 0 : index
    %c0_124 = arith.constant 0 : index
    %163 = vector.load %arg11[%c0_123, %c0_124] : memref<32x128xbf16, #tpu.memory_space<vmem>>, vector<32x128xbf16>
    %cst_125 = arith.constant dense<0.000000e+00> : vector<8x128xf32>
    %164 = tpu.matmul %161, %163, %cst_125 {dimension_numbers = #tpu.dot_dimension_numbers<[1], [0], [0], [1], [0, 0, 1, 1], [], []>} : vector<8x32xbf16>, vector<32x128xbf16>, vector<8x128xf32> -> vector<8x128xf32>
    %c0_126 = arith.constant 0 : index
    %c0_127 = arith.constant 0 : index
    %165 = vector.load %arg12[%c0_126, %c0_127] : memref<1x128xf32, #tpu.memory_space<vmem>>, vector<1x128xf32>
    %166 = vector.broadcast %165 : vector<1x128xf32> to vector<8x128xf32>
    %167 = arith.addf %164, %166 : vector<8x128xf32>
    %cst_128 = arith.constant 5.000000e-01 : f32
    %168 = vector.broadcast %cst_128 : f32 to vector<8x128xf32>
    %169 = arith.mulf %168, %167 : vector<8x128xf32>
    %cst_129 = arith.constant 4.471500e-02 : f32
    %170 = vector.broadcast %cst_129 : f32 to vector<8x128xf32>
    %171 = arith.mulf %170, %167 : vector<8x128xf32>
    %172 = arith.mulf %171, %167 : vector<8x128xf32>
    %173 = arith.mulf %172, %167 : vector<8x128xf32>
    %174 = arith.addf %167, %173 : vector<8x128xf32>
    %cst_130 = arith.constant 0.797884583 : f32
    %175 = vector.broadcast %cst_130 : f32 to vector<8x128xf32>
    %176 = arith.mulf %175, %174 : vector<8x128xf32>
    %177 = math.tanh %176 : vector<8x128xf32>
    %cst_131 = arith.constant 1.000000e+00 : f32
    %178 = vector.broadcast %cst_131 : f32 to vector<8x128xf32>
    %179 = arith.addf %178, %177 : vector<8x128xf32>
    %180 = arith.mulf %169, %179 : vector<8x128xf32>
    %181 = arith.truncf %180 : vector<8x128xf32> to vector<8x128xbf16>
    %c0_132 = arith.constant 0 : index
    %c0_133 = arith.constant 0 : index
    %182 = vector.load %arg13[%c0_132, %c0_133] : memref<128x32xbf16, #tpu.memory_space<vmem>>, vector<128x32xbf16>
    %cst_134 = arith.constant dense<0.000000e+00> : vector<8x32xf32>
    %183 = tpu.matmul %181, %182, %cst_134 {dimension_numbers = #tpu.dot_dimension_numbers<[1], [0], [0], [1], [0, 0, 1, 1], [], []>} : vector<8x128xbf16>, vector<128x32xbf16>, vector<8x32xf32> -> vector<8x32xf32>
    %184 = arith.addf %162, %183 : vector<8x32xf32>
    %c0_135 = arith.constant 0 : index
    %c0_136 = arith.constant 0 : index
    %185 = vector.load %arg14[%c0_135, %c0_136] : memref<1x32xf32, #tpu.memory_space<vmem>>, vector<1x32xf32>
    %186 = vector.broadcast %185 : vector<1x32xf32> to vector<8x32xf32>
    %187 = arith.addf %184, %186 : vector<8x32xf32>
    %188 = arith.addf %136, %187 : vector<8x32xf32>
    %c0_137 = arith.constant 0 : index
    %c0_138 = arith.constant 0 : index
    %c0_139 = arith.constant 0 : index
    %189 = vector.load %arg15[%c0_137, %c0_138, %c0_139] : memref<1x8x32xf32, #tpu.memory_space<vmem>>, vector<1x8x32xf32>
    %190 = vector.shape_cast %189 : vector<1x8x32xf32> to vector<8x32xf32>
    %191 = vector.shape_cast %188 : vector<8x32xf32> to vector<1x8x32xf32>
    tpu.vector_store %arg15[%c0_137, %c0_138, %c0_139], %191 {strides = array<i32>} : memref<1x8x32xf32, #tpu.memory_space<vmem>>, vector<1x8x32xf32>,
    return
  }
  func.func @transform_0(%arg0: i32, %arg1: i32) -> (i32, i32, i32) {
    %c0_i32 = arith.constant 0 : i32
    %c0_i32_0 = arith.constant 0 : i32
    return %arg0, %arg1, %c0_i32 : i32, i32, i32
  }
  func.func @transform_1(%arg0: i32, %arg1: i32) -> (i32, i32) {
    %c0_i32 = arith.constant 0 : i32
    %c0_i32_0 = arith.constant 0 : i32
    %c0_i32_1 = arith.constant 0 : i32
    return %c0_i32, %c0_i32_0 : i32, i32
  }
  func.func @transform_2(%arg0: i32, %arg1: i32) -> (i32, i32) {
    %c0_i32 = arith.constant 0 : i32
    %c0_i32_0 = arith.constant 0 : i32
    %c0_i32_1 = arith.constant 0 : i32
    return %c0_i32, %c0_i32_0 : i32, i32
  }
  func.func @transform_3(%arg0: i32, %arg1: i32) -> (i32, i32) {
    %c0_i32 = arith.constant 0 : i32
    %c0_i32_0 = arith.constant 0 : i32
    %c0_i32_1 = arith.constant 0 : i32
    return %c0_i32, %c0_i32_0 : i32, i32
  }
  func.func @transform_4(%arg0: i32, %arg1: i32) -> (i32, i32) {
    %c0_i32 = arith.constant 0 : i32
    %c0_i32_0 = arith.constant 0 : i32
    %c0_i32_1 = arith.constant 0 : i32
    return %c0_i32, %c0_i32_0 : i32, i32
  }
  func.func @transform_5(%arg0: i32, %arg1: i32) -> (i32, i32) {
    %c0_i32 = arith.constant 0 : i32
    %c0_i32_0 = arith.constant 0 : i32
    %c0_i32_1 = arith.constant 0 : i32
    return %c0_i32, %c0_i32_0 : i32, i32
  }
  func.func @transform_6(%arg0: i32, %arg1: i32) -> (i32, i32) {
    %c0_i32 = arith.constant 0 : i32
    %c0_i32_0 = arith.constant 0 : i32
    %c0_i32_1 = arith.constant 0 : i32
    return %c0_i32, %c0_i32_0 : i32, i32
  }
  func.func @transform_7(%arg0: i32, %arg1: i32) -> (i32, i32) {
    %c0_i32 = arith.constant 0 : i32
    %c0_i32_0 = arith.constant 0 : i32
    %c0_i32_1 = arith.constant 0 : i32
    return %c0_i32, %c0_i32_0 : i32, i32
  }
  func.func @transform_8(%arg0: i32, %arg1: i32) -> (i32, i32) {
    %c0_i32 = arith.constant 0 : i32
    %c0_i32_0 = arith.constant 0 : i32
    %c0_i32_1 = arith.constant 0 : i32
    return %c0_i32, %c0_i32_0 : i32, i32
  }
  func.func @transform_9(%arg0: i32, %arg1: i32) -> (i32, i32) {
    %c0_i32 = arith.constant 0 : i32
    %c0_i32_0 = arith.constant 0 : i32
    %c0_i32_1 = arith.constant 0 : i32
    return %c0_i32, %c0_i32_0 : i32, i32
  }
  func.func @transform_10(%arg0: i32, %arg1: i32) -> (i32, i32) {
    %c0_i32 = arith.constant 0 : i32
    %c0_i32_0 = arith.constant 0 : i32
    %c0_i32_1 = arith.constant 0 : i32
    return %c0_i32, %c0_i32_0 : i32, i32
  }
  func.func @transform_11(%arg0: i32, %arg1: i32) -> (i32, i32) {
    %c0_i32 = arith.constant 0 : i32
    %c0_i32_0 = arith.constant 0 : i32
    %c0_i32_1 = arith.constant 0 : i32
    return %c0_i32, %c0_i32_0 : i32, i32
  }
  func.func @transform_12(%arg0: i32, %arg1: i32) -> (i32, i32) {
    %c0_i32 = arith.constant 0 : i32
    %c0_i32_0 = arith.constant 0 : i32
    %c0_i32_1 = arith.constant 0 : i32
    return %c0_i32, %c0_i32_0 : i32, i32
  }
  func.func @transform_13(%arg0: i32, %arg1: i32) -> (i32, i32, i32) {
    %c0_i32 = arith.constant 0 : i32
    %c0_i32_0 = arith.constant 0 : i32
    return %arg0, %arg1, %c0_i32 : i32, i32, i32
  }
}

</mosaic_0001>

<llo_original>
// kernel: tpu_custom_call.1
$region0: #{tpu_custom_call.1}
  #allocation0 [shape = 'u32[]', space=smem, size = 0x4, offset = 0x4, fixed_abs, tag = 'smem constant byte address 0x4 - core index']
  #allocation1 [shape = 'u32[144,128]{1,0:T(1,128)}', space=vmem, size = 0x12000, scoped, tag = 'internal scratch']
  #allocation2 [shape = 'bf16[8,32]{1,0:T(8,128)(2,1)}', space=vmem, size = 0x800, scoped, tag = 'scratch operand']
  #allocation3 [shape = 'bf16[8,32]{1,0:T(8,128)(2,1)}', space=vmem, size = 0x800, scoped, tag = 'scratch operand']
  #allocation4 [shape = 'bf16[8,32]{1,0:T(8,128)(2,1)}', space=vmem, size = 0x800, scoped, tag = 'scratch operand']
  #allocation5 [shape = 'f32[8,1]{1,0:T(8,128)}', space=vmem, size = 0x1000, scoped, tag = 'scratch operand']
  #allocation6 [shape = 'f32[8,1]{1,0:T(8,128)}', space=vmem, size = 0x1000, scoped, tag = 'scratch operand']
  #allocation7 [shape = 'f32[8,8]{1,0:T(8,128)}', space=vmem, size = 0x1000, scoped, tag = 'scratch operand']
  %s0 = inlined_call_operand.vmem [shape: f32[2,8,32], index: 0, kind: input, shape index: {}]
  %s1 = inlined_call_operand.vmem [shape: f32[1,32], index: 1, kind: input, shape index: {}]
  %s2 = inlined_call_operand.vmem [shape: f32[1,32], index: 2, kind: input, shape index: {}]
  %s3 = inlined_call_operand.vmem [shape: bf16[32,96], index: 3, kind: input, shape index: {}]
  %s4 = inlined_call_operand.vmem [shape: f32[1,96], index: 4, kind: input, shape index: {}]
  %s5 = inlined_call_operand.vmem [shape: bf16[32,32], index: 5, kind: input, shape index: {}]
  %s6 = inlined_call_operand.vmem [shape: f32[1,32], index: 6, kind: input, shape index: {}]
  %s7 = inlined_call_operand.vmem [shape: f32[1,32], index: 7, kind: input, shape index: {}]
  %s8 = inlined_call_operand.vmem [shape: f32[1,32], index: 8, kind: input, shape index: {}]
  %s9 = inlined_call_operand.vmem [shape: bf16[32,128], index: 9, kind: input, shape index: {}]
  %s10 = inlined_call_operand.vmem [shape: f32[1,128], index: 10, kind: input, shape index: {}]
  %s11 = inlined_call_operand.vmem [shape: bf16[128,32], index: 11, kind: input, shape index: {}]
  %s12 = inlined_call_operand.vmem [shape: f32[1,32], index: 12, kind: input, shape index: {}]
  %s13 = inlined_call_operand.hbm [shape: f32[2,8,32], index: 13, kind: output, shape index: {}]
  %s14 = sld [smem:[#allocation0]]
  $region113: #{tpu_custom_call.1} parent=0
    _
  %s16 = ssub.s32 1, %s14
  %s17 = scalar_select 0, %s16, %s14
  $region1: #{tpu_custom_call.1} parent=0
    #allocation8 [shape = 'u8[8192]{0}', space=vmem, size = 0x2000, scoped, tag = 'output window, operand 0']
    #allocation9 [shape = 's32[2]{0}', space=sflag, size = 0x8, scoped, tag = 'scoped memory for tpu_custom_call.1']
    %18 = vsyncpa [#allocation9], 0
    %s19 = scalar_lea.sflag [#allocation9], 1
    %20 = vsyncpa %s19, 0
    loop: start=0, step=1, limit=4
    $region2: #{tpu_custom_call.1} parent=1 // loop_pre_header
      _
    $region3: #{tpu_custom_call.1} parent=1 // loop_header
      %s22 = sphi 0, %s26
      %p23 = scmp.ge.s32.totalorder %s22, 4
      %s29 = sphi 0, %s41
      %s30 = sphi 0, %s37
      %s31 = sphi 0, %s29
      %s32 = sphi 0, %s30
      %s33 = sphi 0, %s31
      %s34 = sphi 0, %s32
      %s46 = sphi 0, %s48
      %s49 = sphi 0, %s46
      %s50 = sphi 0, %s49
      %s66 = sphi 0, %s50
      %s70 = sphi 0, %s70
      %s72 = sphi 0, %s70
      %s73 = sphi 0, %s72
      %s87 = sphi 0, %s73
      %s91 = sphi 0, %s91
      %s93 = sphi 0, %s91
      %s94 = sphi 0, %s93
      %s108 = sphi 0, %s94
      %s112 = sphi 0, %s112
      %s114 = sphi 0, %s112
      %s115 = sphi 0, %s114
      %s129 = sphi 0, %s115
      %s133 = sphi 0, %s133
      %s135 = sphi 0, %s133
      %s136 = sphi 0, %s135
      %s150 = sphi 0, %s136
      %s154 = sphi 0, %s154
      %s156 = sphi 0, %s154
      %s157 = sphi 0, %s156
      %s171 = sphi 0, %s157
      %s175 = sphi 0, %s175
      %s177 = sphi 0, %s175
      %s178 = sphi 0, %s177
      %s192 = sphi 0, %s178
      %s196 = sphi 0, %s196
      %s198 = sphi 0, %s196
      %s199 = sphi 0, %s198
      %s213 = sphi 0, %s199
      %s217 = sphi 0, %s217
      %s219 = sphi 0, %s217
      %s220 = sphi 0, %s219
      %s234 = sphi 0, %s220
      %s238 = sphi 0, %s238
      %s240 = sphi 0, %s238
      %s241 = sphi 0, %s240
      %s255 = sphi 0, %s241
      %s259 = sphi 0, %s259
      %s261 = sphi 0, %s259
      %s262 = sphi 0, %s261
      %s276 = sphi 0, %s262
      %s280 = sphi 0, %s280
      %s282 = sphi 0, %s280
      %s283 = sphi 0, %s282
      %s297 = sphi 0, %s283
      %s301 = sphi 0, %s301
      %s303 = sphi 0, %s301
      %s304 = sphi 0, %s303
      %s318 = sphi 0, %s304
      %s326 = sphi 0, %s328
      %s329 = sphi 0, %s326
      %s330 = sphi 0, %s329
      %s346 = sphi 0, %s330
    $region4: #{tpu_custom_call.1} parent=1 // loop_header_branch
      %25 = sbr.rel (%p23) target = $region8
    $region5: #{tpu_custom_call.1} parent=1 // loop_body
      %s27 = ssub.s32 %s22, 1
      %s28 = ssub.s32 %s22, 2
      %s35 = sadd.s32 1, %s30
      %p36 = scmp.ge.s32.totalorder %s35, 1
      %s37 = scalar_select %p36, 0, %s35
      %s38 = sadd.s32 1, %s29
      %s39 = scalar_select %p36, %s38, %s29
      %p40 = scmp.ge.s32.totalorder %s39, 2
      %s41 = scalar_select %p40, 0, %s39
      %s42 = ssub.s32 %s29, %s41
      %s43 = ssub.s32 %s30, %s37
      %s44 = sor.u32 %s42, %s43
      %p45 = scmp.eq.s32.totalorder %s44, 0
      %s47 = sadd.s32 %s46, 1
      %s48 = scalar_select %p45, %s46, %s47
      %p51 = pneg %p45
      %p52 = scmp.eq.s32.totalorder %s22, 1
      %p53 = por %p51, %p52
      %p54 = scmp.ne.s32.totalorder %s46, %s49
      %p55 = scmp.eq.s32.totalorder %s22, 0
      %p56 = por %p54, %p55
      %p57 = scmp.ne.s32.totalorder %s46, %s49
      %p58 = scmp.eq.s32.totalorder %s27, 1
      %p59 = por %p57, %p58
      %p60 = scmp.ne.s32.totalorder %s49, %s50
      %p61 = scmp.eq.s32.totalorder %s27, 0
      %p62 = por %p60, %p61
      %p63 = scmp.ne.s32.totalorder %s49, %s50
      %p64 = scmp.eq.s32.totalorder %s28, 1
      %p65 = por %p63, %p64
      %p67 = scmp.ne.s32.totalorder %s50, %s66
      %p68 = scmp.eq.s32.totalorder %s28, 0
      %p69 = por %p67, %p68
      %s71 = sadd.s32 %s70, 1
      %p74 = scmp.eq.s32.totalorder %s22, 1
      %p75 = scmp.ne.s32.totalorder %s70, %s72
      %p76 = scmp.eq.s32.totalorder %s22, 0
      %p77 = por %p75, %p76
      %p78 = scmp.ne.s32.totalorder %s70, %s72
      %p79 = scmp.eq.s32.totalorder %s27, 1
      %p80 = por %p78, %p79
      %p81 = scmp.ne.s32.totalorder %s72, %s73
      %p82 = scmp.eq.s32.totalorder %s27, 0
      %p83 = por %p81, %p82
      %p84 = scmp.ne.s32.totalorder %s72, %s73
      %p85 = scmp.eq.s32.totalorder %s28, 1
      %p86 = por %p84, %p85
      %p88 = scmp.ne.s32.totalorder %s73, %s87
      %p89 = scmp.eq.s32.totalorder %s28, 0
      %p90 = por %p88, %p89
      %s92 = sadd.s32 %s91, 1
      %p95 = scmp.eq.s32.totalorder %s22, 1
      %p96 = scmp.ne.s32.totalorder %s91, %s93
      %p97 = scmp.eq.s32.totalorder %s22, 0
      %p98 = por %p96, %p97
      %p99 = scmp.ne.s32.totalorder %s91, %s93
      %p100 = scmp.eq.s32.totalorder %s27, 1
      %p101 = por %p99, %p100
      %p102 = scmp.ne.s32.totalorder %s93, %s94
      %p103 = scmp.eq.s32.totalorder %s27, 0
      %p104 = por %p102, %p103
      %p105 = scmp.ne.s32.totalorder %s93, %s94
      %p106 = scmp.eq.s32.totalorder %s28, 1
      %p107 = por %p105, %p106
      %p109 = scmp.ne.s32.totalorder %s94, %s108
      %p110 = scmp.eq.s32.totalorder %s28, 0
      %p111 = por %p109, %p110
      %s113 = sadd.s32 %s112, 1
      %p116 = scmp.eq.s32.totalorder %s22, 1
      %p117 = scmp.ne.s32.totalorder %s112, %s114
      %p118 = scmp.eq.s32.totalorder %s22, 0
      %p119 = por %p117, %p118
      %p120 = scmp.ne.s32.totalorder %s112, %s114
      %p121 = scmp.eq.s32.totalorder %s27, 1
      %p122 = por %p120, %p121
      %p123 = scmp.ne.s32.totalorder %s114, %s115
      %p124 = scmp.eq.s32.totalorder %s27, 0
      %p125 = por %p123, %p124
      %p126 = scmp.ne.s32.totalorder %s114, %s115
      %p127 = scmp.eq.s32.totalorder %s28, 1
      %p128 = por %p126, %p127
      %p130 = scmp.ne.s32.totalorder %s115, %s129
      %p131 = scmp.eq.s32.totalorder %s28, 0
      %p132 = por %p130, %p131
      %s134 = sadd.s32 %s133, 1
      %p137 = scmp.eq.s32.totalorder %s22, 1
      %p138 = scmp.ne.s32.totalorder %s133, %s135
      %p139 = scmp.eq.s32.totalorder %s22, 0
      %p140 = por %p138, %p139
      %p141 = scmp.ne.s32.totalorder %s133, %s135
      %p142 = scmp.eq.s32.totalorder %s27, 1
      %p143 = por %p141, %p142
      %p144 = scmp.ne.s32.totalorder %s135, %s136
      %p145 = scmp.eq.s32.totalorder %s27, 0
      %p146 = por %p144, %p145
      %p147 = scmp.ne.s32.totalorder %s135, %s136
      %p148 = scmp.eq.s32.totalorder %s28, 1
      %p149 = por %p147, %p148
      %p151 = scmp.ne.s32.totalorder %s136, %s150
      %p152 = scmp.eq.s32.totalorder %s28, 0
      %p153 = por %p151, %p152
      %s155 = sadd.s32 %s154, 1
      %p158 = scmp.eq.s32.totalorder %s22, 1
      %p159 = scmp.ne.s32.totalorder %s154, %s156
      %p160 = scmp.eq.s32.totalorder %s22, 0
      %p161 = por %p159, %p160
      %p162 = scmp.ne.s32.totalorder %s154, %s156
      %p163 = scmp.eq.s32.totalorder %s27, 1
      %p164 = por %p162, %p163
      %p165 = scmp.ne.s32.totalorder %s156, %s157
      %p166 = scmp.eq.s32.totalorder %s27, 0
      %p167 = por %p165, %p166
      %p168 = scmp.ne.s32.totalorder %s156, %s157
      %p169 = scmp.eq.s32.totalorder %s28, 1
      %p170 = por %p168, %p169
      %p172 = scmp.ne.s32.totalorder %s157, %s171
      %p173 = scmp.eq.s32.totalorder %s28, 0
      %p174 = por %p172, %p173
      %s176 = sadd.s32 %s175, 1
      %p179 = scmp.eq.s32.totalorder %s22, 1
      %p180 = scmp.ne.s32.totalorder %s175, %s177
      %p181 = scmp.eq.s32.totalorder %s22, 0
      %p182 = por %p180, %p181
      %p183 = scmp.ne.s32.totalorder %s175, %s177
      %p184 = scmp.eq.s32.totalorder %s27, 1
      %p185 = por %p183, %p184
      %p186 = scmp.ne.s32.totalorder %s177, %s178
      %p187 = scmp.eq.s32.totalorder %s27, 0
      %p188 = por %p186, %p187
      %p189 = scmp.ne.s32.totalorder %s177, %s178
      %p190 = scmp.eq.s32.totalorder %s28, 1
      %p191 = por %p189, %p190
      %p193 = scmp.ne.s32.totalorder %s178, %s192
      %p194 = scmp.eq.s32.totalorder %s28, 0
      %p195 = por %p193, %p194
      %s197 = sadd.s32 %s196, 1
      %p200 = scmp.eq.s32.totalorder %s22, 1
      %p201 = scmp.ne.s32.totalorder %s196, %s198
      %p202 = scmp.eq.s32.totalorder %s22, 0
      %p203 = por %p201, %p202
      %p204 = scmp.ne.s32.totalorder %s196, %s198
      %p205 = scmp.eq.s32.totalorder %s27, 1
      %p206 = por %p204, %p205
      %p207 = scmp.ne.s32.totalorder %s198, %s199
      %p208 = scmp.eq.s32.totalorder %s27, 0
      %p209 = por %p207, %p208
      %p210 = scmp.ne.s32.totalorder %s198, %s199
      %p211 = scmp.eq.s32.totalorder %s28, 1
      %p212 = por %p210, %p211
      %p214 = scmp.ne.s32.totalorder %s199, %s213
      %p215 = scmp.eq.s32.totalorder %s28, 0
      %p216 = por %p214, %p215
      %s218 = sadd.s32 %s217, 1
      %p221 = scmp.eq.s32.totalorder %s22, 1
      %p222 = scmp.ne.s32.totalorder %s217, %s219
      %p223 = scmp.eq.s32.totalorder %s22, 0
      %p224 = por %p222, %p223
      %p225 = scmp.ne.s32.totalorder %s217, %s219
      %p226 = scmp.eq.s32.totalorder %s27, 1
      %p227 = por %p225, %p226
      %p228 = scmp.ne.s32.totalorder %s219, %s220
      %p229 = scmp.eq.s32.totalorder %s27, 0
      %p230 = por %p228, %p229
      %p231 = scmp.ne.s32.totalorder %s219, %s220
      %p232 = scmp.eq.s32.totalorder %s28, 1
      %p233 = por %p231, %p232
      %p235 = scmp.ne.s32.totalorder %s220, %s234
      %p236 = scmp.eq.s32.totalorder %s28, 0
      %p237 = por %p235, %p236
      %s239 = sadd.s32 %s238, 1
      %p242 = scmp.eq.s32.totalorder %s22, 1
      %p243 = scmp.ne.s32.totalorder %s238, %s240
      %p244 = scmp.eq.s32.totalorder %s22, 0
      %p245 = por %p243, %p244
      %p246 = scmp.ne.s32.totalorder %s238, %s240
      %p247 = scmp.eq.s32.totalorder %s27, 1
      %p248 = por %p246, %p247
      %p249 = scmp.ne.s32.totalorder %s240, %s241
      %p250 = scmp.eq.s32.totalorder %s27, 0
      %p251 = por %p249, %p250
      %p252 = scmp.ne.s32.totalorder %s240, %s241
      %p253 = scmp.eq.s32.totalorder %s28, 1
      %p254 = por %p252, %p253
      %p256 = scmp.ne.s32.totalorder %s241, %s255
      %p257 = scmp.eq.s32.totalorder %s28, 0
      %p258 = por %p256, %p257
      %s260 = sadd.s32 %s259, 1
      %p263 = scmp.eq.s32.totalorder %s22, 1
      %p264 = scmp.ne.s32.totalorder %s259, %s261
      %p265 = scmp.eq.s32.totalorder %s22, 0
      %p266 = por %p264, %p265
      %p267 = scmp.ne.s32.totalorder %s259, %s261
      %p268 = scmp.eq.s32.totalorder %s27, 1
      %p269 = por %p267, %p268
      %p270 = scmp.ne.s32.totalorder %s261, %s262
      %p271 = scmp.eq.s32.totalorder %s27, 0
      %p272 = por %p270, %p271
      %p273 = scmp.ne.s32.totalorder %s261, %s262
      %p274 = scmp.eq.s32.totalorder %s28, 1
      %p275 = por %p273, %p274
      %p277 = scmp.ne.s32.totalorder %s262, %s276
      %p278 = scmp.eq.s32.totalorder %s28, 0
      %p279 = por %p277, %p278
      %s281 = sadd.s32 %s280, 1
      %p284 = scmp.eq.s32.totalorder %s22, 1
      %p285 = scmp.ne.s32.totalorder %s280, %s282
      %p286 = scmp.eq.s32.totalorder %s22, 0
      %p287 = por %p285, %p286
      %p288 = scmp.ne.s32.totalorder %s280, %s282
      %p289 = scmp.eq.s32.totalorder %s27, 1
      %p290 = por %p288, %p289
      %p291 = scmp.ne.s32.totalorder %s282, %s283
      %p292 = scmp.eq.s32.totalorder %s27, 0
      %p293 = por %p291, %p292
      %p294 = scmp.ne.s32.totalorder %s282, %s283
      %p295 = scmp.eq.s32.totalorder %s28, 1
      %p296 = por %p294, %p295
      %p298 = scmp.ne.s32.totalorder %s283, %s297
      %p299 = scmp.eq.s32.totalorder %s28, 0
      %p300 = por %p298, %p299
      %s302 = sadd.s32 %s301, 1
      %p305 = scmp.eq.s32.totalorder %s22, 1
      %p306 = scmp.ne.s32.totalorder %s301, %s303
      %p307 = scmp.eq.s32.totalorder %s22, 0
      %p308 = por %p306, %p307
      %p309 = scmp.ne.s32.totalorder %s301, %s303
      %p310 = scmp.eq.s32.totalorder %s27, 1
      %p311 = por %p309, %p310
      %p312 = scmp.ne.s32.totalorder %s303, %s304
      %p313 = scmp.eq.s32.totalorder %s27, 0
      %p314 = por %p312, %p313
      %p315 = scmp.ne.s32.totalorder %s303, %s304
      %p316 = scmp.eq.s32.totalorder %s28, 1
      %p317 = por %p315, %p316
      %p319 = scmp.ne.s32.totalorder %s304, %s318
      %p320 = scmp.eq.s32.totalorder %s28, 0
      %p321 = por %p319, %p320
      %s322 = ssub.s32 %s29, %s41
      %s323 = ssub.s32 %s30, %s37
      %s324 = sor.u32 %s322, %s323
      %p325 = scmp.eq.s32.totalorder %s324, 0
      %s327 = sadd.s32 %s326, 1
      %s328 = scalar_select %p325, %s326, %s327
      %p331 = pneg %p325
      %p332 = scmp.eq.s32.totalorder %s22, 1
      %p333 = por %p331, %p332
      %p334 = scmp.ne.s32.totalorder %s326, %s329
      %p335 = scmp.eq.s32.totalorder %s22, 0
      %p336 = por %p334, %p335
      %p337 = scmp.ne.s32.totalorder %s326, %s329
      %p338 = scmp.eq.s32.totalorder %s27, 1
      %p339 = por %p337, %p338
      %p340 = scmp.ne.s32.totalorder %s329, %s330
      %p341 = scmp.eq.s32.totalorder %s27, 0
      %p342 = por %p340, %p341
      %p343 = scmp.ne.s32.totalorder %s329, %s330
      %p344 = scmp.eq.s32.totalorder %s28, 1
      %p345 = por %p343, %p344
      %p347 = scmp.ne.s32.totalorder %s330, %s346
      %p348 = scmp.eq.s32.totalorder %s28, 0
      %p349 = por %p347, %p348
      %p350 = scmp.le.s32.totalorder 1, %s22
      %p351 = scmp.lt.s32.totalorder %s22, 3
      %p352 = pnand %p350, %p351
      %p353 = pneg %p352
      // Predicated region
      $region9: #{tpu_custom_call.1} parent=5 // pred_check
        _
      $region10: #{tpu_custom_call.1} parent=5 // pred_check_branch
        %355 = sbr.rel (%p352) target = $region12
      $region11: #{tpu_custom_call.1} parent=5 // pred_region
        %s356 = ssub.s32 %s22, 1
        // Predicated region
        $region13: #{tpu_custom_call.1} parent=11 // pred_check
          %p357 = pneg %p83
        $region14: #{tpu_custom_call.1} parent=11 // pred_check_branch
          %359 = sbr.rel (%p357) target = $region16
        $region15: #{tpu_custom_call.1} parent=11 // pred_region
          _
        $region16: #{tpu_custom_call.1} parent=11 // pred_fallthru
          _
        // Predicated region
        $region17: #{tpu_custom_call.1} parent=11 // pred_check
          %p360 = pneg %p104
        $region18: #{tpu_custom_call.1} parent=11 // pred_check_branch
          %362 = sbr.rel (%p360) target = $region20
        $region19: #{tpu_custom_call.1} parent=11 // pred_region
          _
        $region20: #{tpu_custom_call.1} parent=11 // pred_fallthru
          _
        // Predicated region
        $region21: #{tpu_custom_call.1} parent=11 // pred_check
          %p363 = pneg %p125
        $region22: #{tpu_custom_call.1} parent=11 // pred_check_branch
          %365 = sbr.rel (%p363) target = $region24
        $region23: #{tpu_custom_call.1} parent=11 // pred_region
          _
        $region24: #{tpu_custom_call.1} parent=11 // pred_fallthru
          _
        // Predicated region
        $region25: #{tpu_custom_call.1} parent=11 // pred_check
          %p366 = pneg %p146
        $region26: #{tpu_custom_call.1} parent=11 // pred_check_branch
          %368 = sbr.rel (%p366) target = $region28
        $region27: #{tpu_custom_call.1} parent=11 // pred_region
          _
        $region28: #{tpu_custom_call.1} parent=11 // pred_fallthru
          _
        // Predicated region
        $region29: #{tpu_custom_call.1} parent=11 // pred_check
          %p369 = pneg %p167
        $region30: #{tpu_custom_call.1} parent=11 // pred_check_branch
          %371 = sbr.rel (%p369) target = $region32
        $region31: #{tpu_custom_call.1} parent=11 // pred_region
          _
        $region32: #{tpu_custom_call.1} parent=11 // pred_fallthru
          _
        // Predicated region
        $region33: #{tpu_custom_call.1} parent=11 // pred_check
          %p372 = pneg %p188
        $region34: #{tpu_custom_call.1} parent=11 // pred_check_branch
          %374 = sbr.rel (%p372) target = $region36
        $region35: #{tpu_custom_call.1} parent=11 // pred_region
          _
        $region36: #{tpu_custom_call.1} parent=11 // pred_fallthru
          _
        // Predicated region
        $region37: #{tpu_custom_call.1} parent=11 // pred_check
          %p375 = pneg %p209
        $region38: #{tpu_custom_call.1} parent=11 // pred_check_branch
          %377 = sbr.rel (%p375) target = $region40
        $region39: #{tpu_custom_call.1} parent=11 // pred_region
          _
        $region40: #{tpu_custom_call.1} parent=11 // pred_fallthru
          _
        // Predicated region
        $region41: #{tpu_custom_call.1} parent=11 // pred_check
          %p378 = pneg %p230
        $region42: #{tpu_custom_call.1} parent=11 // pred_check_branch
          %380 = sbr.rel (%p378) target = $region44
        $region43: #{tpu_custom_call.1} parent=11 // pred_region
          _
        $region44: #{tpu_custom_call.1} parent=11 // pred_fallthru
          _
        // Predicated region
        $region45: #{tpu_custom_call.1} parent=11 // pred_check
          %p381 = pneg %p251
        $region46: #{tpu_custom_call.1} parent=11 // pred_check_branch
          %383 = sbr.rel (%p381) target = $region48
        $region47: #{tpu_custom_call.1} parent=11 // pred_region
          _
        $region48: #{tpu_custom_call.1} parent=11 // pred_fallthru
          _
        // Predicated region
        $region49: #{tpu_custom_call.1} parent=11 // pred_check
          %p384 = pneg %p272
        $region50: #{tpu_custom_call.1} parent=11 // pred_check_branch
          %386 = sbr.rel (%p384) target = $region52
        $region51: #{tpu_custom_call.1} parent=11 // pred_region
          _
        $region52: #{tpu_custom_call.1} parent=11 // pred_fallthru
          _
        // Predicated region
        $region53: #{tpu_custom_call.1} parent=11 // pred_check
          %p387 = pneg %p293
        $region54: #{tpu_custom_call.1} parent=11 // pred_check_branch
          %389 = sbr.rel (%p387) target = $region56
        $region55: #{tpu_custom_call.1} parent=11 // pred_region
          _
        $region56: #{tpu_custom_call.1} parent=11 // pred_fallthru
          _
        // Predicated region
        $region57: #{tpu_custom_call.1} parent=11 // pred_check
          %p390 = pneg %p314
        $region58: #{tpu_custom_call.1} parent=11 // pred_check_branch
          %392 = sbr.rel (%p390) target = $region60
        $region59: #{tpu_custom_call.1} parent=11 // pred_region
          _
        $region60: #{tpu_custom_call.1} parent=11 // pred_fallthru
          _
      $region12: #{tpu_custom_call.1} parent=5 // pred_fallthru
        _
      %p393 = scmp.lt.s32.totalorder %s22, 2
      // Predicated region
      $region61: #{tpu_custom_call.1} parent=5 // pred_check
        %p394 = pneg %p393
      $region62: #{tpu_custom_call.1} parent=5 // pred_check_branch
        %396 = sbr.rel (%p394) target = $region64
      $region63: #{tpu_custom_call.1} parent=5 // pred_region
        // Predicated region
        $region65: #{tpu_custom_call.1} parent=63 // pred_check
          %p397 = pneg %p56
        $region66: #{tpu_custom_call.1} parent=63 // pred_check_branch
          %399 = sbr.rel (%p397) target = $region68
        $region67: #{tpu_custom_call.1} parent=63 // pred_region
          %p400 = scmp.lt.s32.totalorder %s29, 1
          %s401 = scalar_select %p400, %s29, 1
          %p402 = scmp.lt.s32.totalorder %s30, 0
          %s403 = scalar_select %p402, %s30, 0
          %s404 = sadd.s32 %s403, %s401
          %s405 = smul.addr %s404, 8
          %s406 = scalar_lea.vmem %s0, %s405
        $region68: #{tpu_custom_call.1} parent=63 // pred_fallthru
          _
      $region64: #{tpu_custom_call.1} parent=5 // pred_fallthru
        _
      %p407 = scmp.le.s32.totalorder 1, %s22
      %p408 = scmp.lt.s32.totalorder %s22, 3
      %p409 = pnand %p407, %p408
      %p410 = pneg %p409
      // Predicated region
      $region69: #{tpu_custom_call.1} parent=5 // pred_check
        _
      $region70: #{tpu_custom_call.1} parent=5 // pred_check_branch
        %412 = sbr.rel (%p409) target = $region72
      $region71: #{tpu_custom_call.1} parent=5 // pred_region
        %s413 = ssub.s32 %s22, 1
        %p414 = scmp.lt.s32.totalorder %s31, 1
        %s415 = scalar_select %p414, %s31, 1
        %p416 = scmp.lt.s32.totalorder %s32, 0
        %s417 = scalar_select %p416, %s32, 0
        %s418 = sadd.s32 %s417, %s415
        %s419 = smul.addr %s418, 8
        %s420 = scalar_lea.vmem %s0, %s419
        %p421 = pneg %p62
        %p422 = pneg %p59
        %p423 = pneg %p83
        %p424 = pneg %p80
        %p425 = pneg %p104
        %p426 = pneg %p101
        %p427 = pneg %p125
        %p428 = pneg %p122
        %p429 = pneg %p146
        %p430 = pneg %p143
        %p431 = pneg %p167
        %p432 = pneg %p164
        %p433 = pneg %p188
        %p434 = pneg %p185
        %p435 = pneg %p209
        %p436 = pneg %p206
        %p437 = pneg %p230
        %p438 = pneg %p227
        %p439 = pneg %p251
        %p440 = pneg %p248
        %p441 = pneg %p272
        %p442 = pneg %p269
        %p443 = pneg %p293
        %p444 = pneg %p290
        %p445 = pneg %p314
        %p446 = pneg %p311
        %p447 = pneg %p342
        %p448 = pneg %p339
        %s449 = sand.u32 %s329, 1
        %s450 = scalar_lea.sflag [#allocation9], %s449
        %s451 = sand.u32 %s329, 1
        %s452 = smul.addr %s451, 8
        %s453 = scalar_lea.vmem [#allocation8], %s452
        %p454 = scmp.lt.s32.totalorder %s31, 1
        %s455 = scalar_select %p454, %s31, 1
        %p456 = scmp.lt.s32.totalorder %s32, 0
        %s457 = scalar_select %p456, %s32, 0
        %s458 = sadd.s32 %s457, %s455
        %s459 = smul.addr %s458, 8
        %s460 = scalar_lea.vmem %s0, %s459
        %v462 = vld [vmem:[%s460] sm:$0xff]
        %v463 = vld [vmem:[%s1] sm:$0x1]
        %v464 = vld [vmem:[%s2] sm:$0x1]
        %vm465 = vcmask 261120
        %v466 = vsel %vm465, %v462, 0.0
        %467 = vadd.xlane.f32.xlu0 %v466
        %v468 = vpop.xlane.xlu0 %467
        %v469 = vrcp.pop 32.0
        %v470 = vmul.f32 %v468, %v469
        %v471 = vsub.f32 %v462, %v470
        %v472 = vmul.f32 %v471, %v471
        %v473 = vsel %vm465, %v472, 0.0
        %474 = vadd.xlane.f32.xlu0 %v473
        %v475 = vpop.xlane.xlu0 %474
        %v476 = vmul.f32 %v475, %v469
        %v477 = vadd.f32 %v476, 1e-05
        %v478 = vrsqrt.pop %v477
        %v479 = vmul.f32 %v471, %v478
        %v481 = vlaneseq
        %v482 = vshrl.u32 %v481, 7
        %v483 = vsub.s32 0, %v482
        %v484 = vrot.slane %v463, %v483
        %v486 = vmul.f32 %v479, %v484
        %v488 = vlaneseq
        %v489 = vshrl.u32 %v488, 7
        %v490 = vsub.s32 0, %v489
        %v491 = vrot.slane %v464, %v490
        %v493 = vadd.f32 %v486, %v491
        %v494 = vpack.c.bf16 %v493, %v493
        %v495 = vld [vmem:[%s3] sm:$0xf]
        %v496 = vld [vmem:[%s3 + $0x4] sm:$0xf]
        %v497 = vld [vmem:[%s3 + $0x8] sm:$0xf]
        %v498 = vld [vmem:[%s3 + $0xc] sm:$0xf]
        %v499 = vld [vmem:[%s4] sm:$0x1]
        %v501 = vlaneseq
        %v502 = vshrl.u32 %v501, 7
        %v503 = vsub.s32 0, %v502
        %v504 = vrot.slane %v499, %v503
        %v510 = vunpack.c.l.b16 %v495
        %v511 = vunpack.c.l.b16 %v496
        %v512 = vunpack.c.l.b16 %v497
        %v513 = vunpack.c.l.b16 %v498
        %v514 = vpack.c.b16 %v511, %v510
        %v515 = vpack.c.b16 %v513, %v512
        %v519 = vsel %vm465, %v494, 0
        %521 = vmatprep.subr.bf16.mxu0 0
        %522 = vmatpush1.bf16.msra.mxu0 0
        %523 = vmatprep.subr.bf16.mxu0 0
        %524 = vmatpush1.bf16.msra.mxu0 0
        %525 = vmatprep.subr.bf16.mxu0 0
        %526 = vmatpush1.bf16.msra.mxu0 0
        %527 = vmatprep.subr.bf16.mxu0 0
        %528 = vmatpush1.bf16.msra.mxu0 0
        %529 = vmatprep.subr.bf16.mxu0 0
        %530 = vmatpush1.bf16.msra.mxu0 0
        %531 = vmatprep.subr.bf16.mxu0 0
        %532 = vmatpush1.bf16.msra.mxu0 0
        %533 = vmatprep.subr.bf16.mxu0 0
        %534 = vmatpush1.bf16.msra.mxu0 %v515
        %535 = vmatprep.subr.bf16.mxu0 0
        %536 = vmatpush1.bf16.msra.mxu0 %v514
        %537 = vmatprep.subr.bf16.mxu0 0
        %538 = vmatpush2.bf16.msra.mxu0 0
        %539 = vmatprep.subr.bf16.mxu0 0
        %540 = vmatpush2.bf16.msra.mxu0 0
        %541 = vmatprep.subr.bf16.mxu0 0
        %542 = vmatpush2.bf16.msra.mxu0 0
        %543 = vmatprep.subr.bf16.mxu0 0
        %544 = vmatpush2.bf16.msra.mxu0 0
        %545 = vmatprep.subr.bf16.mxu0 0
        %546 = vmatpush2.bf16.msra.mxu0 0
        %547 = vmatprep.subr.bf16.mxu0 0
        %548 = vmatpush2.bf16.msra.mxu0 0
        %549 = vmatprep.subr.bf16.mxu0 0
        %550 = vmatpush2.bf16.msra.mxu0 0
        %551 = vmatprep.subr.bf16.mxu0 0
        %552 = vmatpush2.bf16.msra.mxu0 0
        %553 = vmatprep.mubr.bf16.mxu0 0
        %554 = vmatmul.mubr.bf16.gmra.mxu0 %v519
        %v555 = vpop.f32.mrf.mxu0
        %v556 = vadd.f32 %v504, %v555
        %v557 = vpop.f32.mrf.mxu0
        %v558 = vpop.f32.mrf.mxu0
        %v559 = vpop.f32.mrf.mxu0
        %560 = vdwg.mxu0
        %v561 = vmul.f32 %v556, 0.35355338
        %v562 = vpack.c.bf16 %v561, %v561
        %s563 = smul.u32 %s32, 8
        %v564 = vpack.c.bf16 %v556, %v556
        %v566 = vunpack.c.l.b16 %v564
        %v567 = vpack.c.b16 %v566, %v566
        %568 = vrot.lane.b32.xlu0 %v567, 96
        %v569 = vpop.permute.xlu0 %568
        %s571 = sshra.s32 %s563, 3
        %s572 = sand.u32 %s563, 7
        %s573 = smul.addr %s571, 4
        %s574 = scalar_lea.vmem [#allocation2], %s573
        %vm575 = vcmask 257024
        %576 = vst.msk [vmem:[%s574] sm:$0xf] %vm575, %v569
        %577 = vrot.lane.b32.xlu0 %v567, 64
        %v578 = vpop.permute.xlu0 %577
        %s580 = smul.addr %s571, 4
        %s581 = scalar_lea.vmem [#allocation3], %s580
        %582 = vst.msk [vmem:[%s581] sm:$0xf] %vm575, %v578
        %v583 = vlaneseq
        %v584 = vshrl.u32 %v583, 7
        %v585 = vlaneseq
        %v586 = vand.u32 %v585, 127
        %vm587 = vcmp.ge.s32.totalorder %v584, %v586
        %s588 = sadd.s32 %s32, 1
        %vm589 = vcmask 7168
        %590 = vst.msk [vmem:[#allocation5] sm:$0xff] %vm589, -1e+30
        %591 = vst.msk [vmem:[#allocation6] sm:$0xff] %vm589, 0.0
        %vm592 = vcmask 64512
        %593 = vst.msk [vmem:[#allocation7] sm:$0xff] %vm592, 0.0
        // While loop
        $region73: #{tpu_custom_call.1} parent=71 // loop_pre_header
          _
        $region74: #{tpu_custom_call.1} parent=71 // loop_header
          %s595 = sphi 0, %s597
          %p596 = scmp.ge.s32.totalorder %s595, %s588
        $region75: #{tpu_custom_call.1} parent=71 // loop_header_branch
          %599 = sbr.rel (%p596) target = $region79
        $region76: #{tpu_custom_call.1} parent=71 // loop_body
          %s600 = smul.u32 %s595, 8
          %s601 = sshra.s32 %s600, 3
          %s602 = sand.u32 %s600, 7
          %s603 = smul.addr %s601, 4
          %s604 = scalar_lea.vmem [#allocation2], %s603
          %v605 = vld [vmem:[%s604] sm:$0xf]
          %s606 = smul.addr %s601, 4
          %s607 = scalar_lea.vmem [#allocation3], %s606
          %v608 = vld [vmem:[%s607] sm:$0xf]
          %v610 = vsel %vm592, %v562, 0
          %v613 = vsel %vm592, %v605, 0
          %615 = vmatprep.subr.bf16.mxu0 0
          %616 = vmatpush1.bf16.xpose.msra.mxu0 0
          %617 = vmatprep.subr.bf16.mxu0 0
          %618 = vmatpush1.bf16.xpose.msra.mxu0 0
          %619 = vmatprep.subr.bf16.mxu0 0
          %620 = vmatpush1.bf16.xpose.msra.mxu0 0
          %621 = vmatprep.subr.bf16.mxu0 0
          %622 = vmatpush1.bf16.xpose.msra.mxu0 0
          %623 = vmatprep.subr.bf16.mxu0 0
          %624 = vmatpush1.bf16.xpose.msra.mxu0 0
          %625 = vmatprep.subr.bf16.mxu0 0
          %626 = vmatpush1.bf16.xpose.msra.mxu0 0
          %627 = vmatprep.subr.bf16.mxu0 0
          %628 = vmatpush1.bf16.xpose.msra.mxu0 0
          %629 = vmatprep.subr.bf16.mxu0 0
          %630 = vmatpush1.bf16.xpose.msra.mxu0 %v613
          %631 = vmatprep.subr.bf16.mxu0 0
          %632 = vmatpush2.bf16.xpose.msra.mxu0 0
          %633 = vmatprep.subr.bf16.mxu0 0
          %634 = vmatpush2.bf16.xpose.msra.mxu0 0
          %635 = vmatprep.subr.bf16.mxu0 0
          %636 = vmatpush2.bf16.xpose.msra.mxu0 0
          %637 = vmatprep.subr.bf16.mxu0 0
          %638 = vmatpush2.bf16.xpose.msra.mxu0 0
          %639 = vmatprep.subr.bf16.mxu0 0
          %640 = vmatpush2.bf16.xpose.msra.mxu0 0
          %641 = vmatprep.subr.bf16.mxu0 0
          %642 = vmatpush2.bf16.xpose.msra.mxu0 0
          %643 = vmatprep.subr.bf16.mxu0 0
          %644 = vmatpush2.bf16.xpose.msra.mxu0 0
          %645 = vmatprep.subr.bf16.mxu0 0
          %646 = vmatpush2.bf16.xpose.msra.mxu0 0
          %647 = vmatprep.mubr.bf16.mxu0 0
          %648 = vmatmul.mubr.bf16.gmra.mxu0 %v610
          %v649 = vpop.f32.mrf.mxu0
          %v650 = vadd.f32 0.0, %v649
          %v651 = vpop.f32.mrf.mxu0
          %v652 = vpop.f32.mrf.mxu0
          %v653 = vpop.f32.mrf.mxu0
          %654 = vdwg.mxu0
          %p655 = scmp.lt.s32.totalorder %s595, %s32
          %s656 = scalar_select %p655, 1, 0
          %v657 = vstv %s656
          %vm658 = vcmp.eq.s32.totalorder %v657, 1
          %vm659 = vmor %vm658, %vm587
          %v660 = vsel %vm659, %v650, -1e+30
          %v661 = vld [vmem:[#allocation5] sm:$0xff]
          %v662 = vsel %vm592, %v660, -inf
          %663 = vmax.xlane.f32.xlu0 %v662
          %v664 = vpop.xlane.xlu0 %663
          %v665 = vmax.f32 %v661, %v664
          %v666 = vsub.f32 %v661, %v665
          %v667 = vmul.f32 %v666, 1.442695
          %v668 = vpow.pop %v667
          %670 = vset.pattern.permute.xlu0 0
          %671 = vperm.xlu0 %670, %v665
          %v672 = vpop.permute.xlu0 %671
          %v674 = vsub.f32 %v660, %v672
          %v675 = vmul.f32 %v674, 1.442695
          %v676 = vpow.pop %v675
          %v677 = vld [vmem:[#allocation6] sm:$0xff]
          %v678 = vmul.f32 %v668, %v677
          %v679 = vsel %vm592, %v676, 0.0
          %680 = vadd.xlane.f32.xlu0 %v679
          %v681 = vpop.xlane.xlu0 %680
          %v682 = vadd.f32 %v678, %v681
          %683 = vst.msk [vmem:[#allocation6] sm:$0xff] %vm589, %v682
          %v684 = vld [vmem:[#allocation7] sm:$0xff]
          %686 = vset.pattern.permute.xlu0 0
          %687 = vperm.xlu0 %686, %v668
          %v688 = vpop.permute.xlu0 %687
          %v690 = vmul.f32 %v688, %v684
          %v691 = vpack.c.bf16 %v676, %v676
          %v693 = vsel %vm592, %v691, 0
          %vm695 = vcmask 1043456
          %v697 = vsel %vm695, %v608, 0
          %699 = vmatprep.subr.bf16.mxu0 0
          %700 = vmatpush1.bf16.msra.mxu0 0
          %701 = vmatprep.subr.bf16.mxu0 0
          %702 = vmatpush1.bf16.msra.mxu0 0
          %703 = vmatprep.subr.bf16.mxu0 0
          %704 = vmatpush1.bf16.msra.mxu0 0
          %705 = vmatprep.subr.bf16.mxu0 0
          %706 = vmatpush1.bf16.msra.mxu0 0
          %707 = vmatprep.subr.bf16.mxu0 0
          %708 = vmatpush1.bf16.msra.mxu0 0
          %709 = vmatprep.subr.bf16.mxu0 0
          %710 = vmatpush1.bf16.msra.mxu0 0
          %711 = vmatprep.subr.bf16.mxu0 0
          %712 = vmatpush1.bf16.msra.mxu0 0
          %713 = vmatprep.subr.bf16.mxu0 0
          %714 = vmatpush1.bf16.msra.mxu0 %v697
          %715 = vmatprep.subr.bf16.mxu0 0
          %716 = vmatpush2.bf16.msra.mxu0 0
          %717 = vmatprep.subr.bf16.mxu0 0
          %718 = vmatpush2.bf16.msra.mxu0 0
          %719 = vmatprep.subr.bf16.mxu0 0
          %720 = vmatpush2.bf16.msra.mxu0 0
          %721 = vmatprep.subr.bf16.mxu0 0
          %722 = vmatpush2.bf16.msra.mxu0 0
          %723 = vmatprep.subr.bf16.mxu0 0
          %724 = vmatpush2.bf16.msra.mxu0 0
          %725 = vmatprep.subr.bf16.mxu0 0
          %726 = vmatpush2.bf16.msra.mxu0 0
          %727 = vmatprep.subr.bf16.mxu0 0
          %728 = vmatpush2.bf16.msra.mxu0 0
          %729 = vmatprep.subr.bf16.mxu0 0
          %730 = vmatpush2.bf16.msra.mxu0 0
          %731 = vmatprep.mubr.bf16.mxu0 0
          %732 = vmatmul.mubr.bf16.gmra.mxu0 %v693
          %v733 = vpop.f32.mrf.mxu0
          %v734 = vadd.f32 0.0, %v733
          %v735 = vpop.f32.mrf.mxu0
          %v736 = vpop.f32.mrf.mxu0
          %v737 = vpop.f32.mrf.mxu0
          %738 = vdwg.mxu0
          %v739 = vadd.f32 %v690, %v734
          %740 = vst.msk [vmem:[#allocation7] sm:$0xff] %vm592, %v739
          %741 = vst.msk [vmem:[#allocation5] sm:$0xff] %vm589, %v665
        $region77: #{tpu_custom_call.1} parent=71 // loop_footer
          %s597 = sadd.s32 %s595, 1
        $region78: #{tpu_custom_call.1} parent=71 // loop_footer_branch
          %594 = sbr.rel target = $region74
        $region79: #{tpu_custom_call.1} parent=71 // loop_exit
          _
        %v742 = vld [vmem:[#allocation6] sm:$0xff]
        %v743 = vrcp.pop %v742
        %v744 = vld [vmem:[#allocation7] sm:$0xff]
        %746 = vset.pattern.permute.xlu0 0
        %747 = vperm.xlu0 %746, %v743
        %v748 = vpop.permute.xlu0 %747
        %v750 = vmul.f32 %v744, %v748
        %v751 = vpack.c.bf16 %v750, %v750
        %vm752 = vcmask 60416
        %753 = vst.msk [vmem:[#allocation4] sm:$0xf] %vm752, %v751
        %754 = vst.msk [vmem:[#allocation5] sm:$0xff] %vm589, -1e+30
        %755 = vst.msk [vmem:[#allocation6] sm:$0xff] %vm589, 0.0
        %756 = vst.msk [vmem:[#allocation7] sm:$0xff] %vm592, 0.0
        // While loop
        $region80: #{tpu_custom_call.1} parent=71 // loop_pre_header
          _
        $region81: #{tpu_custom_call.1} parent=71 // loop_header
          %s758 = sphi 0, %s760
          %p759 = scmp.ge.s32.totalorder %s758, %s588
        $region82: #{tpu_custom_call.1} parent=71 // loop_header_branch
          %762 = sbr.rel (%p759) target = $region86
        $region83: #{tpu_custom_call.1} parent=71 // loop_body
          %s763 = smul.u32 %s758, 8
          %s764 = sshra.s32 %s763, 3
          %s765 = sand.u32 %s763, 7
          %s766 = smul.addr %s764, 4
          %s767 = scalar_lea.vmem [#allocation2], %s766
          %v768 = vld [vmem:[%s767] sm:$0xf]
          %s769 = smul.addr %s764, 4
          %s770 = scalar_lea.vmem [#allocation3], %s769
          %v771 = vld [vmem:[%s770] sm:$0xf]
          %773 = vrot.lane.b32.xlu0 %v562, 120
          %v774 = vpop.permute.xlu0 %773
          %v776 = vunpack.c.l.b16 %v768
          %v777 = vpack.c.b16 %v776, %v776
          %778 = vrot.lane.b32.xlu0 %v777, 120
          %v779 = vpop.permute.xlu0 %778
          %v781 = vsel %vm592, %v774, 0
          %v784 = vsel %vm592, %v779, 0
          %786 = vmatprep.subr.bf16.mxu0 0
          %787 = vmatpush1.bf16.xpose.msra.mxu0 0
          %788 = vmatprep.subr.bf16.mxu0 0
          %789 = vmatpush1.bf16.xpose.msra.mxu0 0
          %790 = vmatprep.subr.bf16.mxu0 0
          %791 = vmatpush1.bf16.xpose.msra.mxu0 0
          %792 = vmatprep.subr.bf16.mxu0 0
          %793 = vmatpush1.bf16.xpose.msra.mxu0 0
          %794 = vmatprep.subr.bf16.mxu0 0
          %795 = vmatpush1.bf16.xpose.msra.mxu0 0
          %796 = vmatprep.subr.bf16.mxu0 0
          %797 = vmatpush1.bf16.xpose.msra.mxu0 0
          %798 = vmatprep.subr.bf16.mxu0 0
          %799 = vmatpush1.bf16.xpose.msra.mxu0 0
          %800 = vmatprep.subr.bf16.mxu0 0
          %801 = vmatpush1.bf16.xpose.msra.mxu0 %v784
          %802 = vmatprep.subr.bf16.mxu0 0
          %803 = vmatpush2.bf16.xpose.msra.mxu0 0
          %804 = vmatprep.subr.bf16.mxu0 0
          %805 = vmatpush2.bf16.xpose.msra.mxu0 0
          %806 = vmatprep.subr.bf16.mxu0 0
          %807 = vmatpush2.bf16.xpose.msra.mxu0 0
          %808 = vmatprep.subr.bf16.mxu0 0
          %809 = vmatpush2.bf16.xpose.msra.mxu0 0
          %810 = vmatprep.subr.bf16.mxu0 0
          %811 = vmatpush2.bf16.xpose.msra.mxu0 0
          %812 = vmatprep.subr.bf16.mxu0 0
          %813 = vmatpush2.bf16.xpose.msra.mxu0 0
          %814 = vmatprep.subr.bf16.mxu0 0
          %815 = vmatpush2.bf16.xpose.msra.mxu0 0
          %816 = vmatprep.subr.bf16.mxu0 0
          %817 = vmatpush2.bf16.xpose.msra.mxu0 0
          %818 = vmatprep.mubr.bf16.mxu0 0
          %819 = vmatmul.mubr.bf16.gmra.mxu0 %v781
          %v820 = vpop.f32.mrf.mxu0
          %v821 = vadd.f32 0.0, %v820
          %v822 = vpop.f32.mrf.mxu0
          %v823 = vpop.f32.mrf.mxu0
          %v824 = vpop.f32.mrf.mxu0
          %825 = vdwg.mxu0
          %p826 = scmp.lt.s32.totalorder %s758, %s32
          %s827 = scalar_select %p826, 1, 0
          %v828 = vstv %s827
          %vm829 = vcmp.eq.s32.totalorder %v828, 1
          %vm830 = vmor %vm829, %vm587
          %v831 = vsel %vm830, %v821, -1e+30
          %v832 = vld [vmem:[#allocation5] sm:$0xff]
          %v833 = vsel %vm592, %v831, -inf
          %834 = vmax.xlane.f32.xlu0 %v833
          %v835 = vpop.xlane.xlu0 %834
          %v836 = vmax.f32 %v832, %v835
          %v837 = vsub.f32 %v832, %v836
          %v838 = vmul.f32 %v837, 1.442695
          %v839 = vpow.pop %v838
          %841 = vset.pattern.permute.xlu0 0
          %842 = vperm.xlu0 %841, %v836
          %v843 = vpop.permute.xlu0 %842
          %v845 = vsub.f32 %v831, %v843
          %v846 = vmul.f32 %v845, 1.442695
          %v847 = vpow.pop %v846
          %v848 = vld [vmem:[#allocation6] sm:$0xff]
          %v849 = vmul.f32 %v839, %v848
          %v850 = vsel %vm592, %v847, 0.0
          %851 = vadd.xlane.f32.xlu0 %v850
          %v852 = vpop.xlane.xlu0 %851
          %v853 = vadd.f32 %v849, %v852
          %854 = vst.msk [vmem:[#allocation6] sm:$0xff] %vm589, %v853
          %v855 = vld [vmem:[#allocation7] sm:$0xff]
          %857 = vset.pattern.permute.xlu0 0
          %858 = vperm.xlu0 %857, %v839
          %v859 = vpop.permute.xlu0 %858
          %v861 = vmul.f32 %v859, %v855
          %v862 = vpack.c.bf16 %v847, %v847
          %v864 = vunpack.c.l.b16 %v771
          %v865 = vpack.c.b16 %v864, %v864
          %866 = vrot.lane.b32.xlu0 %v865, 120
          %v867 = vpop.permute.xlu0 %866
          %v869 = vsel %vm592, %v862, 0
          %vm871 = vcmask 1043456
          %v873 = vsel %vm871, %v867, 0
          %875 = vmatprep.subr.bf16.mxu0 0
          %876 = vmatpush1.bf16.msra.mxu0 0
          %877 = vmatprep.subr.bf16.mxu0 0
          %878 = vmatpush1.bf16.msra.mxu0 0
          %879 = vmatprep.subr.bf16.mxu0 0
          %880 = vmatpush1.bf16.msra.mxu0 0
          %881 = vmatprep.subr.bf16.mxu0 0
          %882 = vmatpush1.bf16.msra.mxu0 0
          %883 = vmatprep.subr.bf16.mxu0 0
          %884 = vmatpush1.bf16.msra.mxu0 0
          %885 = vmatprep.subr.bf16.mxu0 0
          %886 = vmatpush1.bf16.msra.mxu0 0
          %887 = vmatprep.subr.bf16.mxu0 0
          %888 = vmatpush1.bf16.msra.mxu0 0
          %889 = vmatprep.subr.bf16.mxu0 0
          %890 = vmatpush1.bf16.msra.mxu0 %v873
          %891 = vmatprep.subr.bf16.mxu0 0
          %892 = vmatpush2.bf16.msra.mxu0 0
          %893 = vmatprep.subr.bf16.mxu0 0
          %894 = vmatpush2.bf16.msra.mxu0 0
          %895 = vmatprep.subr.bf16.mxu0 0
          %896 = vmatpush2.bf16.msra.mxu0 0
          %897 = vmatprep.subr.bf16.mxu0 0
          %898 = vmatpush2.bf16.msra.mxu0 0
          %899 = vmatprep.subr.bf16.mxu0 0
          %900 = vmatpush2.bf16.msra.mxu0 0
          %901 = vmatprep.subr.bf16.mxu0 0
          %902 = vmatpush2.bf16.msra.mxu0 0
          %903 = vmatprep.subr.bf16.mxu0 0
          %904 = vmatpush2.bf16.msra.mxu0 0
          %905 = vmatprep.subr.bf16.mxu0 0
          %906 = vmatpush2.bf16.msra.mxu0 0
          %907 = vmatprep.mubr.bf16.mxu0 0
          %908 = vmatmul.mubr.bf16.gmra.mxu0 %v869
          %v909 = vpop.f32.mrf.mxu0
          %v910 = vadd.f32 0.0, %v909
          %v911 = vpop.f32.mrf.mxu0
          %v912 = vpop.f32.mrf.mxu0
          %v913 = vpop.f32.mrf.mxu0
          %914 = vdwg.mxu0
          %v915 = vadd.f32 %v861, %v910
          %916 = vst.msk [vmem:[#allocation7] sm:$0xff] %vm592, %v915
          %917 = vst.msk [vmem:[#allocation5] sm:$0xff] %vm589, %v836
        $region84: #{tpu_custom_call.1} parent=71 // loop_footer
          %s760 = sadd.s32 %s758, 1
        $region85: #{tpu_custom_call.1} parent=71 // loop_footer_branch
          %757 = sbr.rel target = $region81
        $region86: #{tpu_custom_call.1} parent=71 // loop_exit
          _
        %v918 = vld [vmem:[#allocation6] sm:$0xff]
        %v919 = vrcp.pop %v918
        %v920 = vld [vmem:[#allocation7] sm:$0xff]
        %922 = vset.pattern.permute.xlu0 0
        %923 = vperm.xlu0 %922, %v919
        %v924 = vpop.permute.xlu0 %923
        %v926 = vmul.f32 %v920, %v924
        %v927 = vpack.c.bf16 %v926, %v926
        %v929 = vunpack.c.l.b16 %v927
        %v930 = vpack.c.b16 %v929, %v929
        %931 = vrot.lane.b32.xlu0 %v930, 8
        %v932 = vpop.permute.xlu0 %931
        %vm934 = vcmask 126016
        %935 = vst.msk [vmem:[#allocation4] sm:$0xf] %vm934, %v932
        %936 = vst.msk [vmem:[#allocation5] sm:$0xff] %vm589, -1e+30
        %937 = vst.msk [vmem:[#allocation6] sm:$0xff] %vm589, 0.0
        %938 = vst.msk [vmem:[#allocation7] sm:$0xff] %vm592, 0.0
        // While loop
        $region87: #{tpu_custom_call.1} parent=71 // loop_pre_header
          _
        $region88: #{tpu_custom_call.1} parent=71 // loop_header
          %s940 = sphi 0, %s942
          %p941 = scmp.ge.s32.totalorder %s940, %s588
        $region89: #{tpu_custom_call.1} parent=71 // loop_header_branch
          %944 = sbr.rel (%p941) target = $region93
        $region90: #{tpu_custom_call.1} parent=71 // loop_body
          %s945 = smul.u32 %s940, 8
          %s946 = sshra.s32 %s945, 3
          %s947 = sand.u32 %s945, 7
          %s948 = smul.addr %s946, 4
          %s949 = scalar_lea.vmem [#allocation2], %s948
          %v950 = vld [vmem:[%s949] sm:$0xf]
          %s951 = smul.addr %s946, 4
          %s952 = scalar_lea.vmem [#allocation3], %s951
          %v953 = vld [vmem:[%s952] sm:$0xf]
          %955 = vrot.lane.b32.xlu0 %v562, 112
          %v956 = vpop.permute.xlu0 %955
          %v958 = vunpack.c.l.b16 %v950
          %v959 = vpack.c.b16 %v958, %v958
          %960 = vrot.lane.b32.xlu0 %v959, 112
          %v961 = vpop.permute.xlu0 %960
          %v963 = vsel %vm592, %v956, 0
          %v966 = vsel %vm592, %v961, 0
          %968 = vmatprep.subr.bf16.mxu0 0
          %969 = vmatpush1.bf16.xpose.msra.mxu0 0
          %970 = vmatprep.subr.bf16.mxu0 0
          %971 = vmatpush1.bf16.xpose.msra.mxu0 0
          %972 = vmatprep.subr.bf16.mxu0 0
          %973 = vmatpush1.bf16.xpose.msra.mxu0 0
          %974 = vmatprep.subr.bf16.mxu0 0
          %975 = vmatpush1.bf16.xpose.msra.mxu0 0
          %976 = vmatprep.subr.bf16.mxu0 0
          %977 = vmatpush1.bf16.xpose.msra.mxu0 0
          %978 = vmatprep.subr.bf16.mxu0 0
          %979 = vmatpush1.bf16.xpose.msra.mxu0 0
          %980 = vmatprep.subr.bf16.mxu0 0
          %981 = vmatpush1.bf16.xpose.msra.mxu0 0
          %982 = vmatprep.subr.bf16.mxu0 0
          %983 = vmatpush1.bf16.xpose.msra.mxu0 %v966
          %984 = vmatprep.subr.bf16.mxu0 0
          %985 = vmatpush2.bf16.xpose.msra.mxu0 0
          %986 = vmatprep.subr.bf16.mxu0 0
          %987 = vmatpush2.bf16.xpose.msra.mxu0 0
          %988 = vmatprep.subr.bf16.mxu0 0
          %989 = vmatpush2.bf16.xpose.msra.mxu0 0
          %990 = vmatprep.subr.bf16.mxu0 0
          %991 = vmatpush2.bf16.xpose.msra.mxu0 0
          %992 = vmatprep.subr.bf16.mxu0 0
          %993 = vmatpush2.bf16.xpose.msra.mxu0 0
          %994 = vmatprep.subr.bf16.mxu0 0
          %995 = vmatpush2.bf16.xpose.msra.mxu0 0
          %996 = vmatprep.subr.bf16.mxu0 0
          %997 = vmatpush2.bf16.xpose.msra.mxu0 0
          %998 = vmatprep.subr.bf16.mxu0 0
          %999 = vmatpush2.bf16.xpose.msra.mxu0 0
          %1000 = vmatprep.mubr.bf16.mxu0 0
          %1001 = vmatmul.mubr.bf16.gmra.mxu0 %v963
          %v1002 = vpop.f32.mrf.mxu0
          %v1003 = vadd.f32 0.0, %v1002
          %v1004 = vpop.f32.mrf.mxu0
          %v1005 = vpop.f32.mrf.mxu0
          %v1006 = vpop.f32.mrf.mxu0
          %1007 = vdwg.mxu0
          %p1008 = scmp.lt.s32.totalorder %s940, %s32
          %s1009 = scalar_select %p1008, 1, 0
          %v1010 = vstv %s1009
          %vm1011 = vcmp.eq.s32.totalorder %v1010, 1
          %vm1012 = vmor %vm1011, %vm587
          %v1013 = vsel %vm1012, %v1003, -1e+30
          %v1014 = vld [vmem:[#allocation5] sm:$0xff]
          %v1015 = vsel %vm592, %v1013, -inf
          %1016 = vmax.xlane.f32.xlu0 %v1015
          %v1017 = vpop.xlane.xlu0 %1016
          %v1018 = vmax.f32 %v1014, %v1017
          %v1019 = vsub.f32 %v1014, %v1018
          %v1020 = vmul.f32 %v1019, 1.442695
          %v1021 = vpow.pop %v1020
          %1023 = vset.pattern.permute.xlu0 0
          %1024 = vperm.xlu0 %1023, %v1018
          %v1025 = vpop.permute.xlu0 %1024
          %v1027 = vsub.f32 %v1013, %v1025
          %v1028 = vmul.f32 %v1027, 1.442695
          %v1029 = vpow.pop %v1028
          %v1030 = vld [vmem:[#allocation6] sm:$0xff]
          %v1031 = vmul.f32 %v1021, %v1030
          %v1032 = vsel %vm592, %v1029, 0.0
          %1033 = vadd.xlane.f32.xlu0 %v1032
          %v1034 = vpop.xlane.xlu0 %1033
          %v1035 = vadd.f32 %v1031, %v1034
          %1036 = vst.msk [vmem:[#allocation6] sm:$0xff] %vm589, %v1035
          %v1037 = vld [vmem:[#allocation7] sm:$0xff]
          %1039 = vset.pattern.permute.xlu0 0
          %1040 = vperm.xlu0 %1039, %v1021
          %v1041 = vpop.permute.xlu0 %1040
          %v1043 = vmul.f32 %v1041, %v1037
          %v1044 = vpack.c.bf16 %v1029, %v1029
          %v1046 = vunpack.c.l.b16 %v953
          %v1047 = vpack.c.b16 %v1046, %v1046
          %1048 = vrot.lane.b32.xlu0 %v1047, 112
          %v1049 = vpop.permute.xlu0 %1048
          %v1051 = vsel %vm592, %v1044, 0
          %vm1053 = vcmask 1043456
          %v1055 = vsel %vm1053, %v1049, 0
          %1057 = vmatprep.subr.bf16.mxu0 0
          %1058 = vmatpush1.bf16.msra.mxu0 0
          %1059 = vmatprep.subr.bf16.mxu0 0
          %1060 = vmatpush1.bf16.msra.mxu0 0
          %1061 = vmatprep.subr.bf16.mxu0 0
          %1062 = vmatpush1.bf16.msra.mxu0 0
          %1063 = vmatprep.subr.bf16.mxu0 0
          %1064 = vmatpush1.bf16.msra.mxu0 0
          %1065 = vmatprep.subr.bf16.mxu0 0
          %1066 = vmatpush1.bf16.msra.mxu0 0
          %1067 = vmatprep.subr.bf16.mxu0 0
          %1068 = vmatpush1.bf16.msra.mxu0 0
          %1069 = vmatprep.subr.bf16.mxu0 0
          %1070 = vmatpush1.bf16.msra.mxu0 0
          %1071 = vmatprep.subr.bf16.mxu0 0
          %1072 = vmatpush1.bf16.msra.mxu0 %v1055
          %1073 = vmatprep.subr.bf16.mxu0 0
          %1074 = vmatpush2.bf16.msra.mxu0 0
          %1075 = vmatprep.subr.bf16.mxu0 0
          %1076 = vmatpush2.bf16.msra.mxu0 0
          %1077 = vmatprep.subr.bf16.mxu0 0
          %1078 = vmatpush2.bf16.msra.mxu0 0
          %1079 = vmatprep.subr.bf16.mxu0 0
          %1080 = vmatpush2.bf16.msra.mxu0 0
          %1081 = vmatprep.subr.bf16.mxu0 0
          %1082 = vmatpush2.bf16.msra.mxu0 0
          %1083 = vmatprep.subr.bf16.mxu0 0
          %1084 = vmatpush2.bf16.msra.mxu0 0
          %1085 = vmatprep.subr.bf16.mxu0 0
          %1086 = vmatpush2.bf16.msra.mxu0 0
          %1087 = vmatprep.subr.bf16.mxu0 0
          %1088 = vmatpush2.bf16.msra.mxu0 0
          %1089 = vmatprep.mubr.bf16.mxu0 0
          %1090 = vmatmul.mubr.bf16.gmra.mxu0 %v1051
          %v1091 = vpop.f32.mrf.mxu0
          %v1092 = vadd.f32 0.0, %v1091
          %v1093 = vpop.f32.mrf.mxu0
          %v1094 = vpop.f32.mrf.mxu0
          %v1095 = vpop.f32.mrf.mxu0
          %1096 = vdwg.mxu0
          %v1097 = vadd.f32 %v1043, %v1092
          %1098 = vst.msk [vmem:[#allocation7] sm:$0xff] %vm592, %v1097
          %1099 = vst.msk [vmem:[#allocation5] sm:$0xff] %vm589, %v1018
        $region91: #{tpu_custom_call.1} parent=71 // loop_footer
          %s942 = sadd.s32 %s940, 1
        $region92: #{tpu_custom_call.1} parent=71 // loop_footer_branch
          %939 = sbr.rel target = $region88
        $region93: #{tpu_custom_call.1} parent=71 // loop_exit
          _
        %v1100 = vld [vmem:[#allocation6] sm:$0xff]
        %v1101 = vrcp.pop %v1100
        %v1102 = vld [vmem:[#allocation7] sm:$0xff]
        %1104 = vset.pattern.permute.xlu0 0
        %1105 = vperm.xlu0 %1104, %v1101
        %v1106 = vpop.permute.xlu0 %1105
        %v1108 = vmul.f32 %v1102, %v1106
        %v1109 = vpack.c.bf16 %v1108, %v1108
        %v1111 = vunpack.c.l.b16 %v1109
        %v1112 = vpack.c.b16 %v1111, %v1111
        %1113 = vrot.lane.b32.xlu0 %v1112, 16
        %v1114 = vpop.permute.xlu0 %1113
        %vm1116 = vcmask 191616
        %1117 = vst.msk [vmem:[#allocation4] sm:$0xf] %vm1116, %v1114
        %1118 = vst.msk [vmem:[#allocation5] sm:$0xff] %vm589, -1e+30
        %1119 = vst.msk [vmem:[#allocation6] sm:$0xff] %vm589, 0.0
        %1120 = vst.msk [vmem:[#allocation7] sm:$0xff] %vm592, 0.0
        // While loop
        $region94: #{tpu_custom_call.1} parent=71 // loop_pre_header
          _
        $region95: #{tpu_custom_call.1} parent=71 // loop_header
          %s1122 = sphi 0, %s1124
          %p1123 = scmp.ge.s32.totalorder %s1122, %s588
        $region96: #{tpu_custom_call.1} parent=71 // loop_header_branch
          %1126 = sbr.rel (%p1123) target = $region100
        $region97: #{tpu_custom_call.1} parent=71 // loop_body
          %s1127 = smul.u32 %s1122, 8
          %s1128 = sshra.s32 %s1127, 3
          %s1129 = sand.u32 %s1127, 7
          %s1130 = smul.addr %s1128, 4
          %s1131 = scalar_lea.vmem [#allocation2], %s1130
          %v1132 = vld [vmem:[%s1131] sm:$0xf]
          %s1133 = smul.addr %s1128, 4
          %s1134 = scalar_lea.vmem [#allocation3], %s1133
          %v1135 = vld [vmem:[%s1134] sm:$0xf]
          %1137 = vrot.lane.b32.xlu0 %v562, 104
          %v1138 = vpop.permute.xlu0 %1137
          %v1140 = vunpack.c.l.b16 %v1132
          %v1141 = vpack.c.b16 %v1140, %v1140
          %1142 = vrot.lane.b32.xlu0 %v1141, 104
          %v1143 = vpop.permute.xlu0 %1142
          %v1145 = vsel %vm592, %v1138, 0
          %v1148 = vsel %vm592, %v1143, 0
          %1150 = vmatprep.subr.bf16.mxu0 0
          %1151 = vmatpush1.bf16.xpose.msra.mxu0 0
          %1152 = vmatprep.subr.bf16.mxu0 0
          %1153 = vmatpush1.bf16.xpose.msra.mxu0 0
          %1154 = vmatprep.subr.bf16.mxu0 0
          %1155 = vmatpush1.bf16.xpose.msra.mxu0 0
          %1156 = vmatprep.subr.bf16.mxu0 0
          %1157 = vmatpush1.bf16.xpose.msra.mxu0 0
          %1158 = vmatprep.subr.bf16.mxu0 0
          %1159 = vmatpush1.bf16.xpose.msra.mxu0 0
          %1160 = vmatprep.subr.bf16.mxu0 0
          %1161 = vmatpush1.bf16.xpose.msra.mxu0 0
          %1162 = vmatprep.subr.bf16.mxu0 0
          %1163 = vmatpush1.bf16.xpose.msra.mxu0 0
          %1164 = vmatprep.subr.bf16.mxu0 0
          %1165 = vmatpush1.bf16.xpose.msra.mxu0 %v1148
          %1166 = vmatprep.subr.bf16.mxu0 0
          %1167 = vmatpush2.bf16.xpose.msra.mxu0 0
          %1168 = vmatprep.subr.bf16.mxu0 0
          %1169 = vmatpush2.bf16.xpose.msra.mxu0 0
          %1170 = vmatprep.subr.bf16.mxu0 0
          %1171 = vmatpush2.bf16.xpose.msra.mxu0 0
          %1172 = vmatprep.subr.bf16.mxu0 0
          %1173 = vmatpush2.bf16.xpose.msra.mxu0 0
          %1174 = vmatprep.subr.bf16.mxu0 0
          %1175 = vmatpush2.bf16.xpose.msra.mxu0 0
          %1176 = vmatprep.subr.bf16.mxu0 0
          %1177 = vmatpush2.bf16.xpose.msra.mxu0 0
          %1178 = vmatprep.subr.bf16.mxu0 0
          %1179 = vmatpush2.bf16.xpose.msra.mxu0 0
          %1180 = vmatprep.subr.bf16.mxu0 0
          %1181 = vmatpush2.bf16.xpose.msra.mxu0 0
          %1182 = vmatprep.mubr.bf16.mxu0 0
          %1183 = vmatmul.mubr.bf16.gmra.mxu0 %v1145
          %v1184 = vpop.f32.mrf.mxu0
          %v1185 = vadd.f32 0.0, %v1184
          %v1186 = vpop.f32.mrf.mxu0
          %v1187 = vpop.f32.mrf.mxu0
          %v1188 = vpop.f32.mrf.mxu0
          %1189 = vdwg.mxu0
          %p1190 = scmp.lt.s32.totalorder %s1122, %s32
          %s1191 = scalar_select %p1190, 1, 0
          %v1192 = vstv %s1191
          %vm1193 = vcmp.eq.s32.totalorder %v1192, 1
          %vm1194 = vmor %vm1193, %vm587
          %v1195 = vsel %vm1194, %v1185, -1e+30
          %v1196 = vld [vmem:[#allocation5] sm:$0xff]
          %v1197 = vsel %vm592, %v1195, -inf
          %1198 = vmax.xlane.f32.xlu0 %v1197
          %v1199 = vpop.xlane.xlu0 %1198
          %v1200 = vmax.f32 %v1196, %v1199
          %v1201 = vsub.f32 %v1196, %v1200
          %v1202 = vmul.f32 %v1201, 1.442695
          %v1203 = vpow.pop %v1202
          %1205 = vset.pattern.permute.xlu0 0
          %1206 = vperm.xlu0 %1205, %v1200
          %v1207 = vpop.permute.xlu0 %1206
          %v1209 = vsub.f32 %v1195, %v1207
          %v1210 = vmul.f32 %v1209, 1.442695
          %v1211 = vpow.pop %v1210
          %v1212 = vld [vmem:[#allocation6] sm:$0xff]
          %v1213 = vmul.f32 %v1203, %v1212
          %v1214 = vsel %vm592, %v1211, 0.0
          %1215 = vadd.xlane.f32.xlu0 %v1214
          %v1216 = vpop.xlane.xlu0 %1215
          %v1217 = vadd.f32 %v1213, %v1216
          %1218 = vst.msk [vmem:[#allocation6] sm:$0xff] %vm589, %v1217
          %v1219 = vld [vmem:[#allocation7] sm:$0xff]
          %1221 = vset.pattern.permute.xlu0 0
          %1222 = vperm.xlu0 %1221, %v1203
          %v1223 = vpop.permute.xlu0 %1222
          %v1225 = vmul.f32 %v1223, %v1219
          %v1226 = vpack.c.bf16 %v1211, %v1211
          %v1228 = vunpack.c.l.b16 %v1135
          %v1229 = vpack.c.b16 %v1228, %v1228
          %1230 = vrot.lane.b32.xlu0 %v1229, 104
          %v1231 = vpop.permute.xlu0 %1230
          %v1233 = vsel %vm592, %v1226, 0
          %vm1235 = vcmask 1043456
          %v1237 = vsel %vm1235, %v1231, 0
          %1239 = vmatprep.subr.bf16.mxu0 0
          %1240 = vmatpush1.bf16.msra.mxu0 0
          %1241 = vmatprep.subr.bf16.mxu0 0
          %1242 = vmatpush1.bf16.msra.mxu0 0
          %1243 = vmatprep.subr.bf16.mxu0 0
          %1244 = vmatpush1.bf16.msra.mxu0 0
          %1245 = vmatprep.subr.bf16.mxu0 0
          %1246 = vmatpush1.bf16.msra.mxu0 0
          %1247 = vmatprep.subr.bf16.mxu0 0
          %1248 = vmatpush1.bf16.msra.mxu0 0
          %1249 = vmatprep.subr.bf16.mxu0 0
          %1250 = vmatpush1.bf16.msra.mxu0 0
          %1251 = vmatprep.subr.bf16.mxu0 0
          %1252 = vmatpush1.bf16.msra.mxu0 0
          %1253 = vmatprep.subr.bf16.mxu0 0
          %1254 = vmatpush1.bf16.msra.mxu0 %v1237
          %1255 = vmatprep.subr.bf16.mxu0 0
          %1256 = vmatpush2.bf16.msra.mxu0 0
          %1257 = vmatprep.subr.bf16.mxu0 0
          %1258 = vmatpush2.bf16.msra.mxu0 0
          %1259 = vmatprep.subr.bf16.mxu0 0
          %1260 = vmatpush2.bf16.msra.mxu0 0
          %1261 = vmatprep.subr.bf16.mxu0 0
          %1262 = vmatpush2.bf16.msra.mxu0 0
          %1263 = vmatprep.subr.bf16.mxu0 0
          %1264 = vmatpush2.bf16.msra.mxu0 0
          %1265 = vmatprep.subr.bf16.mxu0 0
          %1266 = vmatpush2.bf16.msra.mxu0 0
          %1267 = vmatprep.subr.bf16.mxu0 0
          %1268 = vmatpush2.bf16.msra.mxu0 0
          %1269 = vmatprep.subr.bf16.mxu0 0
          %1270 = vmatpush2.bf16.msra.mxu0 0
          %1271 = vmatprep.mubr.bf16.mxu0 0
          %1272 = vmatmul.mubr.bf16.gmra.mxu0 %v1233
          %v1273 = vpop.f32.mrf.mxu0
          %v1274 = vadd.f32 0.0, %v1273
          %v1275 = vpop.f32.mrf.mxu0
          %v1276 = vpop.f32.mrf.mxu0
          %v1277 = vpop.f32.mrf.mxu0
          %1278 = vdwg.mxu0
          %v1279 = vadd.f32 %v1225, %v1274
          %1280 = vst.msk [vmem:[#allocation7] sm:$0xff] %vm592, %v1279
          %1281 = vst.msk [vmem:[#allocation5] sm:$0xff] %vm589, %v1200
        $region98: #{tpu_custom_call.1} parent=71 // loop_footer
          %s1124 = sadd.s32 %s1122, 1
        $region99: #{tpu_custom_call.1} parent=71 // loop_footer_branch
          %1121 = sbr.rel target = $region95
        $region100: #{tpu_custom_call.1} parent=71 // loop_exit
          _
        %v1282 = vld [vmem:[#allocation6] sm:$0xff]
        %v1283 = vrcp.pop %v1282
        %v1284 = vld [vmem:[#allocation7] sm:$0xff]
        %1286 = vset.pattern.permute.xlu0 0
        %1287 = vperm.xlu0 %1286, %v1283
        %v1288 = vpop.permute.xlu0 %1287
        %v1290 = vmul.f32 %v1284, %v1288
        %v1291 = vpack.c.bf16 %v1290, %v1290
        %v1293 = vunpack.c.l.b16 %v1291
        %v1294 = vpack.c.b16 %v1293, %v1293
        %1295 = vrot.lane.b32.xlu0 %v1294, 24
        %v1296 = vpop.permute.xlu0 %1295
        %vm1298 = vcmask 257216
        %1299 = vst.msk [vmem:[#allocation4] sm:$0xf] %vm1298, %v1296
        %v1300 = vld [vmem:[#allocation4] sm:$0xf]
        %v1301 = vld [vmem:[%s5] sm:$0xf]
        %v1302 = vld [vmem:[%s5 + $0x4] sm:$0xf]
        %v1303 = vld [vmem:[%s5 + $0x8] sm:$0xf]
        %v1304 = vld [vmem:[%s5 + $0xc] sm:$0xf]
        %v1305 = vld [vmem:[%s6] sm:$0x1]
        %v1307 = vlaneseq
        %v1308 = vshrl.u32 %v1307, 7
        %v1309 = vsub.s32 0, %v1308
        %v1310 = vrot.slane %v1305, %v1309
        %v1316 = vunpack.c.l.b16 %v1301
        %v1317 = vunpack.c.l.b16 %v1302
        %v1318 = vunpack.c.l.b16 %v1303
        %v1319 = vunpack.c.l.b16 %v1304
        %v1320 = vpack.c.b16 %v1317, %v1316
        %v1321 = vpack.c.b16 %v1319, %v1318
        %v1325 = vsel %vm465, %v1300, 0
        %1327 = vmatprep.subr.bf16.mxu0 0
        %1328 = vmatpush1.bf16.msra.mxu0 0
        %1329 = vmatprep.subr.bf16.mxu0 0
        %1330 = vmatpush1.bf16.msra.mxu0 0
        %1331 = vmatprep.subr.bf16.mxu0 0
        %1332 = vmatpush1.bf16.msra.mxu0 0
        %1333 = vmatprep.subr.bf16.mxu0 0
        %1334 = vmatpush1.bf16.msra.mxu0 0
        %1335 = vmatprep.subr.bf16.mxu0 0
        %1336 = vmatpush1.bf16.msra.mxu0 0
        %1337 = vmatprep.subr.bf16.mxu0 0
        %1338 = vmatpush1.bf16.msra.mxu0 0
        %1339 = vmatprep.subr.bf16.mxu0 0
        %1340 = vmatpush1.bf16.msra.mxu0 %v1321
        %1341 = vmatprep.subr.bf16.mxu0 0
        %1342 = vmatpush1.bf16.msra.mxu0 %v1320
        %1343 = vmatprep.subr.bf16.mxu0 0
        %1344 = vmatpush2.bf16.msra.mxu0 0
        %1345 = vmatprep.subr.bf16.mxu0 0
        %1346 = vmatpush2.bf16.msra.mxu0 0
        %1347 = vmatprep.subr.bf16.mxu0 0
        %1348 = vmatpush2.bf16.msra.mxu0 0
        %1349 = vmatprep.subr.bf16.mxu0 0
        %1350 = vmatpush2.bf16.msra.mxu0 0
        %1351 = vmatprep.subr.bf16.mxu0 0
        %1352 = vmatpush2.bf16.msra.mxu0 0
        %1353 = vmatprep.subr.bf16.mxu0 0
        %1354 = vmatpush2.bf16.msra.mxu0 0
        %1355 = vmatprep.subr.bf16.mxu0 0
        %1356 = vmatpush2.bf16.msra.mxu0 0
        %1357 = vmatprep.subr.bf16.mxu0 0
        %1358 = vmatpush2.bf16.msra.mxu0 0
        %1359 = vmatprep.mubr.bf16.mxu0 0
        %1360 = vmatmul.mubr.bf16.gmra.mxu0 %v1325
        %v1361 = vpop.f32.mrf.mxu0
        %v1362 = vadd.f32 %v1310, %v1361
        %v1363 = vpop.f32.mrf.mxu0
        %v1364 = vpop.f32.mrf.mxu0
        %v1365 = vpop.f32.mrf.mxu0
        %1366 = vdwg.mxu0
        %v1367 = vadd.f32 %v462, %v1362
        %v1368 = vld [vmem:[%s7] sm:$0x1]
        %v1369 = vld [vmem:[%s8] sm:$0x1]
        %v1370 = vsel %vm465, %v1367, 0.0
        %1371 = vadd.xlane.f32.xlu0 %v1370
        %v1372 = vpop.xlane.xlu0 %1371
        %v1373 = vmul.f32 %v1372, %v469
        %v1374 = vsub.f32 %v1367, %v1373
        %v1375 = vmul.f32 %v1374, %v1374
        %v1376 = vsel %vm465, %v1375, 0.0
        %1377 = vadd.xlane.f32.xlu0 %v1376
        %v1378 = vpop.xlane.xlu0 %1377
        %v1379 = vmul.f32 %v1378, %v469
        %v1380 = vadd.f32 %v1379, 1e-05
        %v1381 = vrsqrt.pop %v1380
        %v1382 = vmul.f32 %v1374, %v1381
        %v1384 = vlaneseq
        %v1385 = vshrl.u32 %v1384, 7
        %v1386 = vsub.s32 0, %v1385
        %v1387 = vrot.slane %v1368, %v1386
        %v1389 = vmul.f32 %v1382, %v1387
        %v1391 = vlaneseq
        %v1392 = vshrl.u32 %v1391, 7
        %v1393 = vsub.s32 0, %v1392
        %v1394 = vrot.slane %v1369, %v1393
        %v1396 = vadd.f32 %v1389, %v1394
        %v1397 = vpack.c.bf16 %v1396, %v1396
        %v1398 = vld [vmem:[%s9] sm:$0xf]
        %v1399 = vld [vmem:[%s9 + $0x4] sm:$0xf]
        %v1400 = vld [vmem:[%s9 + $0x8] sm:$0xf]
        %v1401 = vld [vmem:[%s9 + $0xc] sm:$0xf]
        %v1402 = vld [vmem:[%s10] sm:$0x1]
        %v1404 = vlaneseq
        %v1405 = vshrl.u32 %v1404, 7
        %v1406 = vsub.s32 0, %v1405
        %v1407 = vrot.slane %v1402, %v1406
        %v1413 = vunpack.c.l.b16 %v1398
        %v1414 = vunpack.c.l.b16 %v1399
        %v1415 = vunpack.c.l.b16 %v1400
        %v1416 = vunpack.c.l.b16 %v1401
        %v1417 = vpack.c.b16 %v1414, %v1413
        %v1418 = vpack.c.b16 %v1416, %v1415
        %v1422 = vsel %vm465, %v1397, 0
        %1424 = vmatprep.subr.bf16.mxu0 0
        %1425 = vmatpush1.bf16.msra.mxu0 0
        %1426 = vmatprep.subr.bf16.mxu0 0
        %1427 = vmatpush1.bf16.msra.mxu0 0
        %1428 = vmatprep.subr.bf16.mxu0 0
        %1429 = vmatpush1.bf16.msra.mxu0 0
        %1430 = vmatprep.subr.bf16.mxu0 0
        %1431 = vmatpush1.bf16.msra.mxu0 0
        %1432 = vmatprep.subr.bf16.mxu0 0
        %1433 = vmatpush1.bf16.msra.mxu0 0
        %1434 = vmatprep.subr.bf16.mxu0 0
        %1435 = vmatpush1.bf16.msra.mxu0 0
        %1436 = vmatprep.subr.bf16.mxu0 0
        %1437 = vmatpush1.bf16.msra.mxu0 %v1418
        %1438 = vmatprep.subr.bf16.mxu0 0
        %1439 = vmatpush1.bf16.msra.mxu0 %v1417
        %1440 = vmatprep.subr.bf16.mxu0 0
        %1441 = vmatpush2.bf16.msra.mxu0 0
        %1442 = vmatprep.subr.bf16.mxu0 0
        %1443 = vmatpush2.bf16.msra.mxu0 0
        %1444 = vmatprep.subr.bf16.mxu0 0
        %1445 = vmatpush2.bf16.msra.mxu0 0
        %1446 = vmatprep.subr.bf16.mxu0 0
        %1447 = vmatpush2.bf16.msra.mxu0 0
        %1448 = vmatprep.subr.bf16.mxu0 0
        %1449 = vmatpush2.bf16.msra.mxu0 0
        %1450 = vmatprep.subr.bf16.mxu0 0
        %1451 = vmatpush2.bf16.msra.mxu0 0
        %1452 = vmatprep.subr.bf16.mxu0 0
        %1453 = vmatpush2.bf16.msra.mxu0 0
        %1454 = vmatprep.subr.bf16.mxu0 0
        %1455 = vmatpush2.bf16.msra.mxu0 0
        %1456 = vmatprep.mubr.bf16.mxu0 0
        %1457 = vmatmul.mubr.bf16.gmra.mxu0 %v1422
        %v1458 = vpop.f32.mrf.mxu0
        %v1459 = vadd.f32 %v1407, %v1458
        %v1460 = vpop.f32.mrf.mxu0
        %v1461 = vpop.f32.mrf.mxu0
        %v1462 = vpop.f32.mrf.mxu0
        %1463 = vdwg.mxu0
        %v1464 = vmul.f32 %v1459, 0.5
        %v1465 = vmul.f32 %v1459, 0.044715
        %v1466 = vmul.f32 %v1465, %v1459
        %v1467 = vmul.f32 %v1466, %v1459
        %v1468 = vadd.f32 %v1459, %v1467
        %v1469 = vmul.f32 %v1468, 0.7978846
        %v1470 = vtanh.pop %v1469
        %v1471 = vadd.f32 %v1470, 1.0
        %v1472 = vmul.f32 %v1464, %v1471
        %v1473 = vpack.c.bf16 %v1472, %v1472
        %v1474 = vld [vmem:[%s11] sm:$0xf]
        %v1475 = vld [vmem:[%s11 + $0x4] sm:$0xf]
        %v1476 = vld [vmem:[%s11 + $0x8] sm:$0xf]
        %v1477 = vld [vmem:[%s11 + $0xc] sm:$0xf]
        %v1478 = vld [vmem:[%s11 + $0x10] sm:$0xf]
        %v1479 = vld [vmem:[%s11 + $0x14] sm:$0xf]
        %v1480 = vld [vmem:[%s11 + $0x18] sm:$0xf]
        %v1481 = vld [vmem:[%s11 + $0x1c] sm:$0xf]
        %v1482 = vld [vmem:[%s11 + $0x20] sm:$0xf]
        %v1483 = vld [vmem:[%s11 + $0x24] sm:$0xf]
        %v1484 = vld [vmem:[%s11 + $0x28] sm:$0xf]
        %v1485 = vld [vmem:[%s11 + $0x2c] sm:$0xf]
        %v1486 = vld [vmem:[%s11 + $0x30] sm:$0xf]
        %v1487 = vld [vmem:[%s11 + $0x34] sm:$0xf]
        %v1488 = vld [vmem:[%s11 + $0x38] sm:$0xf]
        %v1489 = vld [vmem:[%s11 + $0x3c] sm:$0xf]
        %v1490 = vld [vmem:[%s12] sm:$0x1]
        %v1492 = vlaneseq
        %v1493 = vshrl.u32 %v1492, 7
        %v1494 = vsub.s32 0, %v1493
        %v1495 = vrot.slane %v1490, %v1494
        %v1513 = vunpack.c.l.b16 %v1474
        %v1514 = vunpack.c.l.b16 %v1475
        %v1515 = vunpack.c.l.b16 %v1476
        %v1516 = vunpack.c.l.b16 %v1477
        %v1517 = vunpack.c.l.b16 %v1478
        %v1518 = vunpack.c.l.b16 %v1479
        %v1519 = vunpack.c.l.b16 %v1480
        %v1520 = vunpack.c.l.b16 %v1481
        %v1521 = vunpack.c.l.b16 %v1482
        %v1522 = vunpack.c.l.b16 %v1483
        %v1523 = vunpack.c.l.b16 %v1484
        %v1524 = vunpack.c.l.b16 %v1485
        %v1525 = vunpack.c.l.b16 %v1486
        %v1526 = vunpack.c.l.b16 %v1487
        %v1527 = vunpack.c.l.b16 %v1488
        %v1528 = vunpack.c.l.b16 %v1489
        %v1529 = vpack.c.b16 %v1514, %v1513
        %v1530 = vpack.c.b16 %v1516, %v1515
        %v1531 = vpack.c.b16 %v1518, %v1517
        %v1532 = vpack.c.b16 %v1520, %v1519
        %v1533 = vpack.c.b16 %v1522, %v1521
        %v1534 = vpack.c.b16 %v1524, %v1523
        %v1535 = vpack.c.b16 %v1526, %v1525
        %v1536 = vpack.c.b16 %v1528, %v1527
        %1545 = vmatprep.subr.bf16.mxu0 0
        %1546 = vmatpush1.bf16.msra.mxu0 %v1536
        %1547 = vmatprep.subr.bf16.mxu0 0
        %1548 = vmatpush1.bf16.msra.mxu0 %v1535
        %1549 = vmatprep.subr.bf16.mxu0 0
        %1550 = vmatpush1.bf16.msra.mxu0 %v1534
        %1551 = vmatprep.subr.bf16.mxu0 0
        %1552 = vmatpush1.bf16.msra.mxu0 %v1533
        %1553 = vmatprep.subr.bf16.mxu0 0
        %1554 = vmatpush1.bf16.msra.mxu0 %v1532
        %1555 = vmatprep.subr.bf16.mxu0 0
        %1556 = vmatpush1.bf16.msra.mxu0 %v1531
        %1557 = vmatprep.subr.bf16.mxu0 0
        %1558 = vmatpush1.bf16.msra.mxu0 %v1530
        %1559 = vmatprep.subr.bf16.mxu0 0
        %1560 = vmatpush1.bf16.msra.mxu0 %v1529
        %1561 = vmatprep.subr.bf16.mxu0 0
        %1562 = vmatpush2.bf16.msra.mxu0 0
        %1563 = vmatprep.subr.bf16.mxu0 0
        %1564 = vmatpush2.bf16.msra.mxu0 0
        %1565 = vmatprep.subr.bf16.mxu0 0
        %1566 = vmatpush2.bf16.msra.mxu0 0
        %1567 = vmatprep.subr.bf16.mxu0 0
        %1568 = vmatpush2.bf16.msra.mxu0 0
        %1569 = vmatprep.subr.bf16.mxu0 0
        %1570 = vmatpush2.bf16.msra.mxu0 0
        %1571 = vmatprep.subr.bf16.mxu0 0
        %1572 = vmatpush2.bf16.msra.mxu0 0
        %1573 = vmatprep.subr.bf16.mxu0 0
        %1574 = vmatpush2.bf16.msra.mxu0 0
        %1575 = vmatprep.subr.bf16.mxu0 0
        %1576 = vmatpush2.bf16.msra.mxu0 0
        %1577 = vmatprep.mubr.bf16.mxu0 0
        %1578 = vmatmul.mubr.bf16.gmra.mxu0 %v1473
        %v1579 = vpop.f32.mrf.mxu0
        %v1580 = vadd.f32 %v1495, %v1579
        %v1581 = vpop.f32.mrf.mxu0
        %v1582 = vpop.f32.mrf.mxu0
        %v1583 = vpop.f32.mrf.mxu0
        %1584 = vdwg.mxu0
        %v1585 = vadd.f32 %v1367, %v1580
        %1586 = vst.msk [vmem:[%s453] sm:$0xff] %vm465, %v1585
        %s1587 = sand.u32 %s329, 1
        %s1588 = scalar_lea.sflag [#allocation9], %s1587
        %s1589 = sand.u32 %s329, 1
        %s1590 = smul.addr %s1589, 8
        %s1591 = scalar_lea.vmem [#allocation8], %s1590
        // Predicated region
        $region101: #{tpu_custom_call.1} parent=71 // pred_check
          %p1592 = pneg %p339
        $region102: #{tpu_custom_call.1} parent=71 // pred_check_branch
          %1594 = sbr.rel (%p1592) target = $region104
        $region103: #{tpu_custom_call.1} parent=71 // pred_region
          %s1596 = ssub.s32 128, 128
          %1597 = vsyncadd %s1588, %s1596
          %s1598 = sadd.s32 %s32, %s31
          %s1599 = smul.addr %s1598, 128
          %s1600 = scalar_lea.hbm %s13, %s1599
          %s1602 = sshll.u32 %s1591, 4
          %s1603 = int_to_ptr.vmem [resolvable:$true] %s1602
          %1605 = dma.vmem_to_hbm [thread:$0]  %s1603, 128, %s1600, %s1588
        $region104: #{tpu_custom_call.1} parent=71 // pred_fallthru
          _
      $region72: #{tpu_custom_call.1} parent=5 // pred_fallthru
        _
      %p1606 = scmp.le.s32.totalorder 2, %s22
      // Predicated region
      $region105: #{tpu_custom_call.1} parent=5 // pred_check
        %p1607 = pneg %p1606
      $region106: #{tpu_custom_call.1} parent=5 // pred_check_branch
        %1609 = sbr.rel (%p1607) target = $region108
      $region107: #{tpu_custom_call.1} parent=5 // pred_region
        %s1610 = ssub.s32 %s22, 2
        // Predicated region
        $region109: #{tpu_custom_call.1} parent=107 // pred_check
          %p1611 = pneg %p345
        $region110: #{tpu_custom_call.1} parent=107 // pred_check_branch
          %1613 = sbr.rel (%p1611) target = $region112
        $region111: #{tpu_custom_call.1} parent=107 // pred_region
          %s1614 = sand.u32 %s330, 1
          %s1615 = scalar_lea.sflag [#allocation9], %s1614
          %s1616 = sand.u32 %s330, 1
          %s1617 = smul.addr %s1616, 8
          %s1618 = scalar_lea.vmem [#allocation8], %s1617
          %1619 = dma.done %s1615, 128
        $region112: #{tpu_custom_call.1} parent=107 // pred_fallthru
          _
      $region108: #{tpu_custom_call.1} parent=5 // pred_fallthru
        _
    $region6: #{tpu_custom_call.1} parent=1 // loop_footer
      %s26 = sadd.s32 1, %s22
    $region7: #{tpu_custom_call.1} parent=1 // loop_footer_branch
      %21 = sbr.rel target = $region3
    $region8: #{tpu_custom_call.1} parent=1 // loop_exit
      _
    %1620 = vsyncpa [#allocation9], 1
    %s1621 = scalar_lea.sflag [#allocation9], 1
    %1622 = vsyncpa %s1621, 1

</llo_original>
